<compile_context>
chip_gen: v5e
topology: v5e:2x2
jax: 0.10.0
libtpu: 0.0.40
codegen_flags: <defaults>
</compile_context>

<pallas_src>
import functools
import math

import jax
import jax.numpy as jnp
from jax.experimental import pallas as pl
from jax.experimental.pallas import tpu as pltpu


# ----------------------------- in-kernel helpers -----------------------------

def _ln(x, g, b, eps=1e-12):
    # x: (S, D) f32; g/b: (1, D) f32
    mu = jnp.mean(x, axis=-1, keepdims=True)
    xc = x - mu
    var = jnp.mean(xc * xc, axis=-1, keepdims=True)
    return xc * jax.lax.rsqrt(var + eps) * g + b


def _gelu(x):
    # TODO(synk): BERT uses exact erf-GELU; tanh approximation used for Mosaic-safe lowering.
    return 0.5 * x * (1.0 + jnp.tanh(0.7978845608028654 * (x + 0.044715 * x * x * x)))


# ----------------------------- Pallas kernels --------------------------------

def encoder_kernel(x_ref, m_ref,
                   wqkv_ref, bqkv_ref, wo_ref, bo_ref, g1_ref, b1_ref,
                   wi_ref, bi_ref, wo2_ref, bo2_ref, g2_ref, b2_ref,
                   out_ref, *, num_heads, head_dim):
    """One BERT encoder layer for one batch element.  grid = (batch, layer).

    The activation is carried across the layer axis inside the resident output
    block (its index_map only depends on the batch coordinate)."""
    l = pl.program_id(1)

    @pl.when(l == 0)
    def _():
        out_ref[0] = x_ref[0]                       # seed carried activation (bf16)

    x = out_ref[0].astype(jnp.float32)              # (S, H) f32
    S, H = x.shape

    # ---- fused QKV projection: one MXU pass, bf16 operands, f32 accumulation ----
    qkv = jnp.dot(x.astype(jnp.bfloat16), wqkv_ref[0],
                  preferred_element_type=jnp.float32) + bqkv_ref[0]     # (S, 3H) f32
    qkv16 = qkv.astype(jnp.bfloat16)

    # head-batched tensors (num_heads, S, head_dim); leading-axis stack (cheap),
    # no lane-dim concatenate anywhere in the layer.
    q = jnp.stack([qkv16[:, h * head_dim:(h + 1) * head_dim]
                   for h in range(num_heads)], axis=0)
    k = jnp.stack([qkv16[:, H + h * head_dim:H + (h + 1) * head_dim]
                   for h in range(num_heads)], axis=0)
    v = jnp.stack([qkv16[:, 2 * H + h * head_dim:2 * H + (h + 1) * head_dim]
                   for h in range(num_heads)], axis=0)

    scale = 1.0 / math.sqrt(head_dim)
    mask_add = (1.0 - m_ref[0]) * (-10000.0)        # (1, S) f32

    # batched scores over heads: (nh, S, S)
    s = jnp.einsum('hqd,hkd->hqk', q, k, preferred_element_type=jnp.float32) * scale
    s = s + mask_add[None]                          # broadcast (1,1,S)
    smax = jnp.max(s, axis=-1, keepdims=True)
    p = jnp.exp(s - smax)
    p = p * pl.reciprocal(jnp.sum(p, axis=-1, keepdims=True), approx=True)

    # batched context: (nh, S, hd)
    ctx = jnp.einsum('hqk,hkd->hqd', p.astype(jnp.bfloat16), v,
                     preferred_element_type=jnp.float32)

    # output projection: accumulate per head (wo stored as (nh, hd, H)) -> (S, H)
    attn = jnp.zeros((S, H), jnp.float32) + bo_ref[0]
    for h in range(num_heads):
        attn = attn + jnp.dot(ctx[h].astype(jnp.bfloat16), wo_ref[0, h],
                              preferred_element_type=jnp.float32)

    x1 = _ln(x + attn, g1_ref[0], b1_ref[0])        # (S, H) f32

    # ---- FFN ----
    hmid = jnp.dot(x1.astype(jnp.bfloat16), wi_ref[0],
                   preferred_element_type=jnp.float32) + bi_ref[0]      # (S, I) f32
    hmid = _gelu(hmid)
    ffn = jnp.dot(hmid.astype(jnp.bfloat16), wo2_ref[0],
                  preferred_element_type=jnp.float32) + bo2_ref[0]      # (S, H) f32
    y = _ln(x1 + ffn, g2_ref[0], b2_ref[0])

    out_ref[0] = y.astype(out_ref.dtype)            # carried / final activation (bf16)


def classify_softmax_kernel(x_ref, w_ref, b_ref, out_ref):
    """classify Linear + softmax(dim=-1) for one batch element."""
    # TODO(synk): for realistic vocab (~30k) tile the V axis (grid axis + online LSE);
    # at V=128 the whole (H,V) weight and (S,V) logits block comfortably fit VMEM.
    x = x_ref[0]                                                        # (S, H) bf16
    logits = jnp.dot(x, w_ref[...], preferred_element_type=jnp.float32) + b_ref[...]
    m = jnp.max(logits, axis=-1, keepdims=True)
    e = jnp.exp(logits - m)
    inv = pl.reciprocal(jnp.sum(e, axis=-1, keepdims=True), approx=True)
    out_ref[0] = (e * inv).astype(out_ref.dtype)


def classify_ce_kernel(x_ref, w_ref, b_ref, y_ref, loss_ref, tot_ref, cnt_ref):
    """classify Linear + CrossEntropyLoss(ignore_index=-1), mean over valid tokens.

    grid=(B,), 'arbitrary': per-batch blocks, scratch accumulators, pl.when finalize."""
    b = pl.program_id(0)

    @pl.when(b == 0)
    def _():
        tot_ref[...] = jnp.zeros_like(tot_ref)
        cnt_ref[...] = jnp.zeros_like(cnt_ref)

    x = x_ref[0]                                                        # (S, H) bf16
    logits = jnp.dot(x, w_ref[...], preferred_element_type=jnp.float32) + b_ref[...]
    y = y_ref[0]                                                        # (S, 1) int32
    valid = (y != -1).astype(jnp.float32)                               # (S, 1)
    iota = jax.lax.broadcasted_iota(jnp.int32, logits.shape, 1)
    onehot = (iota == y).astype(jnp.float32)                            # (S, V)
    m = jnp.max(logits, axis=-1, keepdims=True)
    lse = jnp.log(jnp.sum(jnp.exp(logits - m), axis=-1, keepdims=True)) + m
    picked = jnp.sum(onehot * logits, axis=-1, keepdims=True)
    nll = (lse - picked) * valid                                        # (S, 1)

    tot_ref[...] += jnp.sum(nll, axis=0, keepdims=True)
    cnt_ref[...] += jnp.sum(valid, axis=0, keepdims=True)

    @pl.when(b == pl.num_programs(0) - 1)
    def _():
        cnt = jnp.maximum(cnt_ref[...], 1.0)     # guard: all labels == -1 -> loss 0
        loss_ref[...] = tot_ref[...] / cnt


# ----------------------------- wrappers ---------------------------------------

def run_encoder(x, mask01, p):
    """All L encoder layers in a single pallas_call.  x: (B,S,H) bf16, mask01: (B,1,S) f32."""
    B, S, H = x.shape
    L = p["wqkv"].shape[0]
    I = p["wi"].shape[2]
    nh = p["num_heads"]
    hd = H // nh
    kern = functools.partial(encoder_kernel, num_heads=nh, head_dim=hd)

    def wspec(shp):  # per-layer stacked weight: block (1, *shp), indexed by layer coord
        return pl.BlockSpec((1,) + shp, lambda b, l: (l,) + (0,) * len(shp))

    in_specs = [
        pl.BlockSpec((1, S, H), lambda b, l: (b, 0, 0)),     # x (only DMA'd once per b)
        pl.BlockSpec((1, 1, S), lambda b, l: (b, 0, 0)),     # attention mask (0/1)
        wspec((H, 3 * H)), wspec((1, 3 * H)),                # fused Wqkv, bqkv
        wspec((nh, hd, H)), wspec((1, H)),                   # Wo (per-head), bo
        wspec((1, H)), wspec((1, H)),                        # ln1 gamma/beta
        wspec((H, I)), wspec((1, I)),                        # FFN in
        wspec((I, H)), wspec((1, H)),                        # FFN out
        wspec((1, H)), wspec((1, H)),                        # ln2 gamma/beta
    ]
    return pl.pallas_call(
        kern,
        out_shape=jax.ShapeDtypeStruct((B, S, H), jnp.bfloat16),
        grid=(B, L),
        in_specs=in_specs,
        out_specs=pl.BlockSpec((1, S, H), lambda b, l: (b, 0, 0)),   # resident across l
        compiler_params=pltpu.CompilerParams(
            dimension_semantics=("parallel", "arbitrary"),
            vmem_limit_bytes=48 * 1024 * 1024),   # explicit budget, fits v7x's 64 MiB
    )(x, mask01,
      p["wqkv"], p["bqkv"], p["wo"], p["bo"], p["g1"], p["b1"],
      p["wi"], p["bi"], p["wo2"], p["bo2"], p["g2"], p["b2"])


def classify_softmax(x, w, b):
    B, S, H = x.shape
    V = w.shape[1]
    return pl.pallas_call(
        classify_softmax_kernel,
        out_shape=jax.ShapeDtypeStruct((B, S, V), jnp.float32),
        grid=(B,),
        in_specs=[pl.BlockSpec((1, S, H), lambda i: (i, 0, 0)),
                  pl.BlockSpec((H, V), lambda i: (0, 0)),
                  pl.BlockSpec((1, V), lambda i: (0, 0))],
        out_specs=pl.BlockSpec((1, S, V), lambda i: (i, 0, 0)),
        compiler_params=pltpu.CompilerParams(dimension_semantics=("parallel",)),
    )(x, w, b)


def classify_ce(x, w, b, y):
    B, S, H = x.shape
    V = w.shape[1]
    y3 = y.astype(jnp.int32).reshape(B, S, 1)
    loss = pl.pallas_call(
        classify_ce_kernel,
        out_shape=jax.ShapeDtypeStruct((1, 1), jnp.float32),
        grid=(B,),
        in_specs=[pl.BlockSpec((1, S, H), lambda i: (i, 0, 0)),
                  pl.BlockSpec((H, V), lambda i: (0, 0)),
                  pl.BlockSpec((1, V), lambda i: (0, 0)),
                  pl.BlockSpec((1, S, 1), lambda i: (i, 0, 0))],
        out_specs=pl.BlockSpec((1, 1), lambda i: (0, 0)),
        scratch_shapes=[pltpu.VMEM((1, 1), jnp.float32),     # running total
                        pltpu.VMEM((1, 1), jnp.float32)],    # running valid count
        compiler_params=pltpu.CompilerParams(dimension_semantics=("arbitrary",)),
    )(x, w, b, y3)
    return loss[0, 0]


def embed(params, ids):
    # TODO(synk): embedding gather + embedding LayerNorm kept in plain JAX (no per-tile
    # Pallas win for a table gather at these sizes).
    we = jnp.take(params["word_emb"], ids, axis=0)                    # (B, S, H) f32
    pe = params["pos_emb"][: ids.shape[1]][None]                      # (1, S, H)
    te = params["type_emb"][0][None, None]                            # (1, 1, H)
    e = we + pe + te
    mu = jnp.mean(e, axis=-1, keepdims=True)
    var = jnp.mean((e - mu) ** 2, axis=-1, keepdims=True)
    return (e - mu) * jax.lax.rsqrt(var + 1e-12) * params["emb_ln_g"] + params["emb_ln_b"]


def language_model_forward(params, x_ids, y=None, mask=None):
    """Mirrors LanguageModel.forward:
       y given  -> CrossEntropy(ignore_index=-1) over classify(bert(x, mask))
       y absent -> softmax(classify(bert(x)), dim=-1)
    """
    B, S = x_ids.shape
    if mask is None:
        mask01 = jnp.ones((B, 1, S), jnp.float32)
    else:
        mask01 = mask.astype(jnp.float32).reshape(B, 1, S)
    h = embed(params, x_ids).astype(jnp.bfloat16)
    h = run_encoder(h, mask01, params)
    if y is not None:
        return classify_ce(h, params["cls_w"], params["cls_b"], y)
    return classify_softmax(h, params["cls_w"], params["cls_b"])


# ----------------------------- parameters -------------------------------------

def init_params(key, vocab, hidden, inter, layers, num_heads, max_pos):
    hd = hidden // num_heads
    keys = iter(jax.random.split(key, 16))

    def nrm(shape, dtype=jnp.bfloat16):
        return (0.02 * jax.random.normal(next(keys), shape, jnp.float32)).astype(dtype)

    return dict(
        num_heads=num_heads,
        # embeddings / LM head
        word_emb=nrm((vocab, hidden), jnp.float32),
        pos_emb=nrm((max_pos, hidden), jnp.float32),
        type_emb=nrm((2, hidden), jnp.float32),
        emb_ln_g=jnp.ones((hidden,), jnp.float32),
        emb_ln_b=jnp.zeros((hidden,), jnp.float32),
        cls_w=nrm((hidden, vocab), jnp.bfloat16),
        cls_b=jnp.zeros((1, vocab), jnp.float32),
        # encoder weights, stacked along a leading layer axis (bf16 matmul operands,
        # f32 biases / LayerNorm params)
        wqkv=nrm((layers, hidden, 3 * hidden)),
        bqkv=jnp.zeros((layers, 1, 3 * hidden), jnp.float32),
        wo=nrm((layers, num_heads, hd, hidden)),
        bo=jnp.zeros((layers, 1, hidden), jnp.float32),
        g1=jnp.ones((layers, 1, hidden), jnp.float32),
        b1=jnp.zeros((layers, 1, hidden), jnp.float32),
        wi=nrm((layers, hidden, inter)),
        bi=jnp.zeros((layers, 1, inter), jnp.float32),
        wo2=nrm((layers, inter, hidden)),
        bo2=jnp.zeros((layers, 1, hidden), jnp.float32),
        g2=jnp.ones((layers, 1, hidden), jnp.float32),
        b2=jnp.zeros((layers, 1, hidden), jnp.float32),
    )


# ----------------------------- main --------------------------------------------

if __name__ == "__main__":
    # lane-dense small shapes: H, V, 3H, I are multiples of 128; S = 8 (one sublane group)
    VOCAB, HIDDEN, INTER, LAYERS, HEADS, MAXPOS = 128, 128, 256, 2, 2, 16
    B, S = 2, 8

    key = jax.random.PRNGKey(0)
    kp, kx, ky = jax.random.split(key, 3)
    params = init_params(kp, VOCAB, HIDDEN, INTER, LAYERS, HEADS, MAXPOS)

    x_ids = jax.random.randint(kx, (B, S), 0, VOCAB, dtype=jnp.int32)

    # Inference path (y=None): softmax over vocab.
    probs = jax.block_until_ready(language_model_forward(params, x_ids))
    assert probs.shape == (B, S, VOCAB)
    assert bool(jnp.allclose(jnp.sum(probs, axis=-1), 1.0, atol=5e-3))

    # Training path: CrossEntropy with ignore_index=-1 (SFT-style: some positions ignored).
    y = jax.random.randint(ky, (B, S), 0, VOCAB, dtype=jnp.int32)
    y = y.at[:, 0].set(-1)
    mask = jnp.ones((B, S), jnp.float32)
    loss = jax.block_until_ready(language_model_forward(params, x_ids, y=y, mask=mask))
    assert bool(jnp.isfinite(loss))

    print("KERNEL_OK")
</pallas_src>

<mosaic_0001>
module attributes {stable_mosaic.version = 11 : i64} {
  func.func @encoder_kernel(%arg0: i32, %arg1: i32, %arg2: memref<1x8x128xbf16, #tpu.memory_space<vmem>>, %arg3: memref<1x1x8xf32, #tpu.memory_space<vmem>>, %arg4: memref<1x128x384xbf16, #tpu.memory_space<vmem>>, %arg5: memref<1x1x384xf32, #tpu.memory_space<vmem>>, %arg6: memref<1x2x64x128xbf16, #tpu.memory_space<vmem>>, %arg7: memref<1x1x128xf32, #tpu.memory_space<vmem>>, %arg8: memref<1x1x128xf32, #tpu.memory_space<vmem>>, %arg9: memref<1x1x128xf32, #tpu.memory_space<vmem>>, %arg10: memref<1x128x256xbf16, #tpu.memory_space<vmem>>, %arg11: memref<1x1x256xf32, #tpu.memory_space<vmem>>, %arg12: memref<1x256x128xbf16, #tpu.memory_space<vmem>>, %arg13: memref<1x1x128xf32, #tpu.memory_space<vmem>>, %arg14: memref<1x1x128xf32, #tpu.memory_space<vmem>>, %arg15: memref<1x1x128xf32, #tpu.memory_space<vmem>>, %arg16: memref<1x8x128xbf16, #tpu.memory_space<vmem>>) attributes {dimension_semantics = [#tpu.dimension_semantics<parallel>, #tpu.dimension_semantics<arbitrary>], iteration_bounds = array<i64: 2, 2>, scalar_prefetch = 0 : i64, scratch_operands = 0 : i64, tpu.core_type = #tpu.core_type<tc>, window_params = [{transform_indices = @transform_0, window_bounds = array<i64: 1, 8, 128>}, {transform_indices = @transform_1, window_bounds = array<i64: 1, 1, 8>}, {transform_indices = @transform_2, window_bounds = array<i64: 1, 128, 384>}, {transform_indices = @transform_3, window_bounds = array<i64: 1, 1, 384>}, {transform_indices = @transform_4, window_bounds = array<i64: 1, 2, 64, 128>}, {transform_indices = @transform_5, window_bounds = array<i64: 1, 1, 128>}, {transform_indices = @transform_6, window_bounds = array<i64: 1, 1, 128>}, {transform_indices = @transform_7, window_bounds = array<i64: 1, 1, 128>}, {transform_indices = @transform_8, window_bounds = array<i64: 1, 128, 256>}, {transform_indices = @transform_9, window_bounds = array<i64: 1, 1, 256>}, {transform_indices = @transform_10, window_bounds = array<i64: 1, 256, 128>}, {transform_indices = @transform_11, window_bounds = array<i64: 1, 1, 128>}, {transform_indices = @transform_12, window_bounds = array<i64: 1, 1, 128>}, {transform_indices = @transform_13, window_bounds = array<i64: 1, 1, 128>}, {transform_indices = @transform_14, window_bounds = array<i64: 1, 8, 128>}]} {
    %c0_i32 = arith.constant 0 : i32
    %0 = arith.cmpi eq, %arg1, %c0_i32 : i32
    %1 = arith.extui %0 : i1 to i32
    %c0_i32_0 = arith.constant 0 : i32
    %2 = arith.cmpi ne, %1, %c0_i32_0 : i32
    scf.if %2 {
      %c0_75 = arith.constant 0 : index
      %c0_76 = arith.constant 0 : index
      %c0_77 = arith.constant 0 : index
      %156 = vector.load %arg2[%c0_75, %c0_76, %c0_77] : memref<1x8x128xbf16, #tpu.memory_space<vmem>>, vector<1x8x128xbf16>
      %157 = vector.shape_cast %156 : vector<1x8x128xbf16> to vector<8x128xbf16>
      %c0_78 = arith.constant 0 : index
      %c0_79 = arith.constant 0 : index
      %c0_80 = arith.constant 0 : index
      %158 = vector.load %arg16[%c0_78, %c0_79, %c0_80] : memref<1x8x128xbf16, #tpu.memory_space<vmem>>, vector<1x8x128xbf16>
      %159 = vector.shape_cast %158 : vector<1x8x128xbf16> to vector<8x128xbf16>
      %160 = vector.shape_cast %157 : vector<8x128xbf16> to vector<1x8x128xbf16>
      tpu.vector_store %arg16[%c0_78, %c0_79, %c0_80], %160 {strides = array<i32>} : memref<1x8x128xbf16, #tpu.memory_space<vmem>>, vector<1x8x128xbf16>,
    } else {
    }
    %c0 = arith.constant 0 : index
    %c0_1 = arith.constant 0 : index
    %c0_2 = arith.constant 0 : index
    %3 = vector.load %arg16[%c0, %c0_1, %c0_2] : memref<1x8x128xbf16, #tpu.memory_space<vmem>>, vector<1x8x128xbf16>
    %4 = vector.shape_cast %3 : vector<1x8x128xbf16> to vector<8x128xbf16>
    %5 = arith.extf %4 : vector<8x128xbf16> to vector<8x128xf32>
    %6 = arith.truncf %5 : vector<8x128xf32> to vector<8x128xbf16>
    %c0_3 = arith.constant 0 : index
    %c0_4 = arith.constant 0 : index
    %c0_5 = arith.constant 0 : index
    %7 = vector.load %arg4[%c0_3, %c0_4, %c0_5] : memref<1x128x384xbf16, #tpu.memory_space<vmem>>, vector<1x128x384xbf16>
    %8 = vector.shape_cast %7 : vector<1x128x384xbf16> to vector<128x384xbf16>
    %cst = arith.constant dense<0.000000e+00> : vector<8x384xf32>
    %9 = tpu.matmul %6, %8, %cst {dimension_numbers = #tpu.dot_dimension_numbers<[1], [0], [0], [1], [0, 0, 1, 1], [], []>} : vector<8x128xbf16>, vector<128x384xbf16>, vector<8x384xf32> -> vector<8x384xf32>
    %c0_6 = arith.constant 0 : index
    %c0_7 = arith.constant 0 : index
    %c0_8 = arith.constant 0 : index
    %10 = vector.load %arg5[%c0_6, %c0_7, %c0_8] : memref<1x1x384xf32, #tpu.memory_space<vmem>>, vector<1x1x384xf32>
    %11 = vector.shape_cast %10 : vector<1x1x384xf32> to vector<1x384xf32>
    %12 = vector.broadcast %11 : vector<1x384xf32> to vector<8x384xf32>
    %13 = arith.addf %9, %12 : vector<8x384xf32>
    %14 = arith.truncf %13 : vector<8x384xf32> to vector<8x384xbf16>
    %15 = vector.extract_strided_slice %14 {offsets = [0, 0], sizes = [8, 64], strides = [1, 1]} : vector<8x384xbf16> to vector<8x64xbf16>
    %16 = vector.extract_strided_slice %14 {offsets = [0, 64], sizes = [8, 64], strides = [1, 1]} : vector<8x384xbf16> to vector<8x64xbf16>
    %17 = vector.shape_cast %15 : vector<8x64xbf16> to vector<1x8x64xbf16>
    %18 = vector.shape_cast %16 : vector<8x64xbf16> to vector<1x8x64xbf16>
    %19 = tpu.concatenate %17, %18 in 0 : vector<1x8x64xbf16>, vector<1x8x64xbf16> -> vector<2x8x64xbf16>
    %20 = vector.extract_strided_slice %14 {offsets = [0, 128], sizes = [8, 64], strides = [1, 1]} : vector<8x384xbf16> to vector<8x64xbf16>
    %21 = vector.extract_strided_slice %14 {offsets = [0, 192], sizes = [8, 64], strides = [1, 1]} : vector<8x384xbf16> to vector<8x64xbf16>
    %22 = vector.shape_cast %20 : vector<8x64xbf16> to vector<1x8x64xbf16>
    %23 = vector.shape_cast %21 : vector<8x64xbf16> to vector<1x8x64xbf16>
    %24 = tpu.concatenate %22, %23 in 0 : vector<1x8x64xbf16>, vector<1x8x64xbf16> -> vector<2x8x64xbf16>
    %25 = vector.extract_strided_slice %14 {offsets = [0, 256], sizes = [8, 64], strides = [1, 1]} : vector<8x384xbf16> to vector<8x64xbf16>
    %26 = vector.extract_strided_slice %14 {offsets = [0, 320], sizes = [8, 64], strides = [1, 1]} : vector<8x384xbf16> to vector<8x64xbf16>
    %27 = vector.shape_cast %25 : vector<8x64xbf16> to vector<1x8x64xbf16>
    %28 = vector.shape_cast %26 : vector<8x64xbf16> to vector<1x8x64xbf16>
    %29 = tpu.concatenate %27, %28 in 0 : vector<1x8x64xbf16>, vector<1x8x64xbf16> -> vector<2x8x64xbf16>
    %c0_9 = arith.constant 0 : index
    %c0_10 = arith.constant 0 : index
    %c0_11 = arith.constant 0 : index
    %30 = vector.load %arg3[%c0_9, %c0_10, %c0_11] : memref<1x1x8xf32, #tpu.memory_space<vmem>>, vector<1x1x8xf32>
    %31 = vector.shape_cast %30 : vector<1x1x8xf32> to vector<1x8xf32>
    %cst_12 = arith.constant 1.000000e+00 : f32
    %32 = vector.broadcast %cst_12 : f32 to vector<1x8xf32>
    %33 = arith.subf %32, %31 : vector<1x8xf32>
    %cst_13 = arith.constant -1.000000e+04 : f32
    %34 = vector.broadcast %cst_13 : f32 to vector<1x8xf32>
    %35 = arith.mulf %33, %34 : vector<1x8xf32>
    "tpu.trace_start"() <{level = 10 : i32, message = "hqd,hkd->hqk"}> : () -> ()
    %cst_14 = arith.constant dense<0.000000e+00> : vector<2x8x8xf32>
    %36 = tpu.matmul %19, %24, %cst_14 {dimension_numbers = #tpu.dot_dimension_numbers<[2], [2], [1], [1], [0, 0, 0, 1, 1, 1], [0], [0]>} : vector<2x8x64xbf16>, vector<2x8x64xbf16>, vector<2x8x8xf32> -> vector<2x8x8xf32>
    "tpu.trace_stop"() : () -> ()
    %cst_15 = arith.constant 1.250000e-01 : f32
    %37 = vector.broadcast %cst_15 : f32 to vector<2x8x8xf32>
    %38 = arith.mulf %36, %37 : vector<2x8x8xf32>
    %39 = vector.shape_cast %35 : vector<1x8xf32> to vector<1x1x8xf32>
    %40 = vector.broadcast %39 : vector<1x1x8xf32> to vector<2x8x8xf32>
    %41 = arith.addf %38, %40 : vector<2x8x8xf32>
    %cst_16 = arith.constant dense<0xFF800000> : vector<2x8xf32>
    %42 = vector.multi_reduction <maximumf>, %41, %cst_16 [2] : vector<2x8x8xf32> to vector<2x8xf32>
    %43 = vector.shape_cast %42 : vector<2x8xf32> to vector<2x8x1xf32>
    %44 = vector.broadcast %43 : vector<2x8x1xf32> to vector<2x8x8xf32>
    %45 = arith.subf %41, %44 : vector<2x8x8xf32>
    %46 = math.exp %45 : vector<2x8x8xf32>
    %cst_17 = arith.constant dense<0.000000e+00> : vector<2x8xf32>
    %47 = vector.multi_reduction <add>, %46, %cst_17 [2] : vector<2x8x8xf32> to vector<2x8xf32>
    %48 = vector.shape_cast %47 : vector<2x8xf32> to vector<2x8x1xf32>
    %49 = tpu.reciprocal %48 {approx = true} : vector<2x8x1xf32> -> vector<2x8x1xf32>
    %50 = vector.broadcast %49 : vector<2x8x1xf32> to vector<2x8x8xf32>
    %51 = arith.mulf %46, %50 : vector<2x8x8xf32>
    %52 = arith.truncf %51 : vector<2x8x8xf32> to vector<2x8x8xbf16>
    "tpu.trace_start"() <{level = 10 : i32, message = "hqk,hkd->hqd"}> : () -> ()
    %cst_18 = arith.constant dense<0.000000e+00> : vector<2x8x64xf32>
    %53 = tpu.matmul %52, %29, %cst_18 {dimension_numbers = #tpu.dot_dimension_numbers<[2], [1], [1], [2], [0, 0, 0, 1, 1, 2], [0], [0]>} : vector<2x8x8xbf16>, vector<2x8x64xbf16>, vector<2x8x64xf32> -> vector<2x8x64xf32>
    %cst_19 = arith.constant 0.000000e+00 : f32
    "tpu.trace_stop"() : () -> ()
    %54 = vector.broadcast %cst_19 : f32 to vector<8x128xf32>
    %c0_20 = arith.constant 0 : index
    %c0_21 = arith.constant 0 : index
    %c0_22 = arith.constant 0 : index
    %55 = vector.load %arg7[%c0_20, %c0_21, %c0_22] : memref<1x1x128xf32, #tpu.memory_space<vmem>>, vector<1x1x128xf32>
    %56 = vector.shape_cast %55 : vector<1x1x128xf32> to vector<1x128xf32>
    %57 = vector.broadcast %56 : vector<1x128xf32> to vector<8x128xf32>
    %58 = arith.addf %54, %57 : vector<8x128xf32>
    %59 = vector.extract_strided_slice %53 {offsets = [0, 0, 0], sizes = [1, 8, 64], strides = [1, 1, 1]} : vector<2x8x64xf32> to vector<1x8x64xf32>
    %60 = vector.shape_cast %59 : vector<1x8x64xf32> to vector<8x64xf32>
    %61 = arith.truncf %60 : vector<8x64xf32> to vector<8x64xbf16>
    %c0_23 = arith.constant 0 : index
    %c0_24 = arith.constant 0 : index
    %c0_25 = arith.constant 0 : index
    %c0_26 = arith.constant 0 : index
    %62 = vector.load %arg6[%c0_23, %c0_24, %c0_25, %c0_26] : memref<1x2x64x128xbf16, #tpu.memory_space<vmem>>, vector<1x1x64x128xbf16>
    %63 = vector.shape_cast %62 : vector<1x1x64x128xbf16> to vector<64x128xbf16>
    %cst_27 = arith.constant dense<0.000000e+00> : vector<8x128xf32>
    %64 = tpu.matmul %61, %63, %cst_27 {dimension_numbers = #tpu.dot_dimension_numbers<[1], [0], [0], [1], [0, 0, 1, 1], [], []>} : vector<8x64xbf16>, vector<64x128xbf16>, vector<8x128xf32> -> vector<8x128xf32>
    %65 = arith.addf %58, %64 : vector<8x128xf32>
    %66 = vector.extract_strided_slice %53 {offsets = [1, 0, 0], sizes = [1, 8, 64], strides = [1, 1, 1]} : vector<2x8x64xf32> to vector<1x8x64xf32>
    %67 = vector.shape_cast %66 : vector<1x8x64xf32> to vector<8x64xf32>
    %68 = arith.truncf %67 : vector<8x64xf32> to vector<8x64xbf16>
    %c0_28 = arith.constant 0 : index
    %c1 = arith.constant 1 : index
    %c0_29 = arith.constant 0 : index
    %c0_30 = arith.constant 0 : index
    %69 = vector.load %arg6[%c0_28, %c1, %c0_29, %c0_30] : memref<1x2x64x128xbf16, #tpu.memory_space<vmem>>, vector<1x1x64x128xbf16>
    %70 = vector.shape_cast %69 : vector<1x1x64x128xbf16> to vector<64x128xbf16>
    %cst_31 = arith.constant dense<0.000000e+00> : vector<8x128xf32>
    %71 = tpu.matmul %68, %70, %cst_31 {dimension_numbers = #tpu.dot_dimension_numbers<[1], [0], [0], [1], [0, 0, 1, 1], [], []>} : vector<8x64xbf16>, vector<64x128xbf16>, vector<8x128xf32> -> vector<8x128xf32>
    %72 = arith.addf %65, %71 : vector<8x128xf32>
    %73 = arith.addf %5, %72 : vector<8x128xf32>
    %c0_32 = arith.constant 0 : index
    %c0_33 = arith.constant 0 : index
    %c0_34 = arith.constant 0 : index
    %74 = vector.load %arg8[%c0_32, %c0_33, %c0_34] : memref<1x1x128xf32, #tpu.memory_space<vmem>>, vector<1x1x128xf32>
    %75 = vector.shape_cast %74 : vector<1x1x128xf32> to vector<1x128xf32>
    %c0_35 = arith.constant 0 : index
    %c0_36 = arith.constant 0 : index
    %c0_37 = arith.constant 0 : index
    %76 = vector.load %arg9[%c0_35, %c0_36, %c0_37] : memref<1x1x128xf32, #tpu.memory_space<vmem>>, vector<1x1x128xf32>
    %77 = vector.shape_cast %76 : vector<1x1x128xf32> to vector<1x128xf32>
    %cst_38 = arith.constant dense<0.000000e+00> : vector<8xf32>
    %78 = vector.multi_reduction <add>, %73, %cst_38 [1] : vector<8x128xf32> to vector<8xf32>
    %79 = vector.shape_cast %78 : vector<8xf32> to vector<8x1xf32>
    %cst_39 = arith.constant 1.280000e+02 : f32
    %80 = vector.broadcast %cst_39 : f32 to vector<8x1xf32>
    %81 = arith.divf %79, %80 : vector<8x1xf32>
    %82 = vector.broadcast %81 : vector<8x1xf32> to vector<8x128xf32>
    %83 = arith.subf %73, %82 : vector<8x128xf32>
    %84 = arith.mulf %83, %83 : vector<8x128xf32>
    %cst_40 = arith.constant dense<0.000000e+00> : vector<8xf32>
    %85 = vector.multi_reduction <add>, %84, %cst_40 [1] : vector<8x128xf32> to vector<8xf32>
    %86 = vector.shape_cast %85 : vector<8xf32> to vector<8x1xf32>
    %cst_41 = arith.constant 1.280000e+02 : f32
    %87 = vector.broadcast %cst_41 : f32 to vector<8x1xf32>
    %88 = arith.divf %86, %87 : vector<8x1xf32>
    %cst_42 = arith.constant 9.99999996E-13 : f32
    %89 = vector.broadcast %cst_42 : f32 to vector<8x1xf32>
    %90 = arith.addf %88, %89 : vector<8x1xf32>
    %91 = math.rsqrt %90 : vector<8x1xf32>
    %92 = vector.broadcast %91 : vector<8x1xf32> to vector<8x128xf32>
    %93 = arith.mulf %83, %92 : vector<8x128xf32>
    %94 = vector.broadcast %75 : vector<1x128xf32> to vector<8x128xf32>
    %95 = arith.mulf %93, %94 : vector<8x128xf32>
    %96 = vector.broadcast %77 : vector<1x128xf32> to vector<8x128xf32>
    %97 = arith.addf %95, %96 : vector<8x128xf32>
    %98 = arith.truncf %97 : vector<8x128xf32> to vector<8x128xbf16>
    %c0_43 = arith.constant 0 : index
    %c0_44 = arith.constant 0 : index
    %c0_45 = arith.constant 0 : index
    %99 = vector.load %arg10[%c0_43, %c0_44, %c0_45] : memref<1x128x256xbf16, #tpu.memory_space<vmem>>, vector<1x128x256xbf16>
    %100 = vector.shape_cast %99 : vector<1x128x256xbf16> to vector<128x256xbf16>
    %cst_46 = arith.constant dense<0.000000e+00> : vector<8x256xf32>
    %101 = tpu.matmul %98, %100, %cst_46 {dimension_numbers = #tpu.dot_dimension_numbers<[1], [0], [0], [1], [0, 0, 1, 1], [], []>} : vector<8x128xbf16>, vector<128x256xbf16>, vector<8x256xf32> -> vector<8x256xf32>
    %c0_47 = arith.constant 0 : index
    %c0_48 = arith.constant 0 : index
    %c0_49 = arith.constant 0 : index
    %102 = vector.load %arg11[%c0_47, %c0_48, %c0_49] : memref<1x1x256xf32, #tpu.memory_space<vmem>>, vector<1x1x256xf32>
    %103 = vector.shape_cast %102 : vector<1x1x256xf32> to vector<1x256xf32>
    %104 = vector.broadcast %103 : vector<1x256xf32> to vector<8x256xf32>
    %105 = arith.addf %101, %104 : vector<8x256xf32>
    %cst_50 = arith.constant 5.000000e-01 : f32
    %106 = vector.broadcast %cst_50 : f32 to vector<8x256xf32>
    %107 = arith.mulf %106, %105 : vector<8x256xf32>
    %cst_51 = arith.constant 4.471500e-02 : f32
    %108 = vector.broadcast %cst_51 : f32 to vector<8x256xf32>
    %109 = arith.mulf %108, %105 : vector<8x256xf32>
    %110 = arith.mulf %109, %105 : vector<8x256xf32>
    %111 = arith.mulf %110, %105 : vector<8x256xf32>
    %112 = arith.addf %105, %111 : vector<8x256xf32>
    %cst_52 = arith.constant 0.797884583 : f32
    %113 = vector.broadcast %cst_52 : f32 to vector<8x256xf32>
    %114 = arith.mulf %113, %112 : vector<8x256xf32>
    %115 = math.tanh %114 : vector<8x256xf32>
    %cst_53 = arith.constant 1.000000e+00 : f32
    %116 = vector.broadcast %cst_53 : f32 to vector<8x256xf32>
    %117 = arith.addf %116, %115 : vector<8x256xf32>
    %118 = arith.mulf %107, %117 : vector<8x256xf32>
    %119 = arith.truncf %118 : vector<8x256xf32> to vector<8x256xbf16>
    %c0_54 = arith.constant 0 : index
    %c0_55 = arith.constant 0 : index
    %c0_56 = arith.constant 0 : index
    %120 = vector.load %arg12[%c0_54, %c0_55, %c0_56] : memref<1x256x128xbf16, #tpu.memory_space<vmem>>, vector<1x256x128xbf16>
    %121 = vector.shape_cast %120 : vector<1x256x128xbf16> to vector<256x128xbf16>
    %cst_57 = arith.constant dense<0.000000e+00> : vector<8x128xf32>
    %122 = tpu.matmul %119, %121, %cst_57 {dimension_numbers = #tpu.dot_dimension_numbers<[1], [0], [0], [1], [0, 0, 1, 1], [], []>} : vector<8x256xbf16>, vector<256x128xbf16>, vector<8x128xf32> -> vector<8x128xf32>
    %c0_58 = arith.constant 0 : index
    %c0_59 = arith.constant 0 : index
    %c0_60 = arith.constant 0 : index
    %123 = vector.load %arg13[%c0_58, %c0_59, %c0_60] : memref<1x1x128xf32, #tpu.memory_space<vmem>>, vector<1x1x128xf32>
    %124 = vector.shape_cast %123 : vector<1x1x128xf32> to vector<1x128xf32>
    %125 = vector.broadcast %124 : vector<1x128xf32> to vector<8x128xf32>
    %126 = arith.addf %122, %125 : vector<8x128xf32>
    %127 = arith.addf %97, %126 : vector<8x128xf32>
    %c0_61 = arith.constant 0 : index
    %c0_62 = arith.constant 0 : index
    %c0_63 = arith.constant 0 : index
    %128 = vector.load %arg14[%c0_61, %c0_62, %c0_63] : memref<1x1x128xf32, #tpu.memory_space<vmem>>, vector<1x1x128xf32>
    %129 = vector.shape_cast %128 : vector<1x1x128xf32> to vector<1x128xf32>
    %c0_64 = arith.constant 0 : index
    %c0_65 = arith.constant 0 : index
    %c0_66 = arith.constant 0 : index
    %130 = vector.load %arg15[%c0_64, %c0_65, %c0_66] : memref<1x1x128xf32, #tpu.memory_space<vmem>>, vector<1x1x128xf32>
    %131 = vector.shape_cast %130 : vector<1x1x128xf32> to vector<1x128xf32>
    %cst_67 = arith.constant dense<0.000000e+00> : vector<8xf32>
    %132 = vector.multi_reduction <add>, %127, %cst_67 [1] : vector<8x128xf32> to vector<8xf32>
    %133 = vector.shape_cast %132 : vector<8xf32> to vector<8x1xf32>
    %cst_68 = arith.constant 1.280000e+02 : f32
    %134 = vector.broadcast %cst_68 : f32 to vector<8x1xf32>
    %135 = arith.divf %133, %134 : vector<8x1xf32>
    %136 = vector.broadcast %135 : vector<8x1xf32> to vector<8x128xf32>
    %137 = arith.subf %127, %136 : vector<8x128xf32>
    %138 = arith.mulf %137, %137 : vector<8x128xf32>
    %cst_69 = arith.constant dense<0.000000e+00> : vector<8xf32>
    %139 = vector.multi_reduction <add>, %138, %cst_69 [1] : vector<8x128xf32> to vector<8xf32>
    %140 = vector.shape_cast %139 : vector<8xf32> to vector<8x1xf32>
    %cst_70 = arith.constant 1.280000e+02 : f32
    %141 = vector.broadcast %cst_70 : f32 to vector<8x1xf32>
    %142 = arith.divf %140, %141 : vector<8x1xf32>
    %cst_71 = arith.constant 9.99999996E-13 : f32
    %143 = vector.broadcast %cst_71 : f32 to vector<8x1xf32>
    %144 = arith.addf %142, %143 : vector<8x1xf32>
    %145 = math.rsqrt %144 : vector<8x1xf32>
    %146 = vector.broadcast %145 : vector<8x1xf32> to vector<8x128xf32>
    %147 = arith.mulf %137, %146 : vector<8x128xf32>
    %148 = vector.broadcast %129 : vector<1x128xf32> to vector<8x128xf32>
    %149 = arith.mulf %147, %148 : vector<8x128xf32>
    %150 = vector.broadcast %131 : vector<1x128xf32> to vector<8x128xf32>
    %151 = arith.addf %149, %150 : vector<8x128xf32>
    %152 = arith.truncf %151 : vector<8x128xf32> to vector<8x128xbf16>
    %c0_72 = arith.constant 0 : index
    %c0_73 = arith.constant 0 : index
    %c0_74 = arith.constant 0 : index
    %153 = vector.load %arg16[%c0_72, %c0_73, %c0_74] : memref<1x8x128xbf16, #tpu.memory_space<vmem>>, vector<1x8x128xbf16>
    %154 = vector.shape_cast %153 : vector<1x8x128xbf16> to vector<8x128xbf16>
    %155 = vector.shape_cast %152 : vector<8x128xbf16> to vector<1x8x128xbf16>
    tpu.vector_store %arg16[%c0_72, %c0_73, %c0_74], %155 {strides = array<i32>} : memref<1x8x128xbf16, #tpu.memory_space<vmem>>, vector<1x8x128xbf16>,
    return
  }
  func.func @transform_0(%arg0: i32, %arg1: i32) -> (i32, i32, i32) {
    %c0_i32 = arith.constant 0 : i32
    %c0_i32_0 = arith.constant 0 : i32
    %c0_i32_1 = arith.constant 0 : i32
    return %arg0, %c0_i32, %c0_i32_0 : i32, i32, i32
  }
  func.func @transform_1(%arg0: i32, %arg1: i32) -> (i32, i32, i32) {
    %c0_i32 = arith.constant 0 : i32
    %c0_i32_0 = arith.constant 0 : i32
    %c0_i32_1 = arith.constant 0 : i32
    return %arg0, %c0_i32, %c0_i32_0 : i32, i32, i32
  }
  func.func @transform_2(%arg0: i32, %arg1: i32) -> (i32, i32, i32) {
    %c0_i32 = arith.constant 0 : i32
    %c0_i32_0 = arith.constant 0 : i32
    %c0_i32_1 = arith.constant 0 : i32
    return %arg1, %c0_i32, %c0_i32_0 : i32, i32, i32
  }
  func.func @transform_3(%arg0: i32, %arg1: i32) -> (i32, i32, i32) {
    %c0_i32 = arith.constant 0 : i32
    %c0_i32_0 = arith.constant 0 : i32
    %c0_i32_1 = arith.constant 0 : i32
    return %arg1, %c0_i32, %c0_i32_0 : i32, i32, i32
  }
  func.func @transform_4(%arg0: i32, %arg1: i32) -> (i32, i32, i32, i32) {
    %c0_i32 = arith.constant 0 : i32
    %c0_i32_0 = arith.constant 0 : i32
    %c0_i32_1 = arith.constant 0 : i32
    %c0_i32_2 = arith.constant 0 : i32
    return %arg1, %c0_i32, %c0_i32_0, %c0_i32_1 : i32, i32, i32, i32
  }
  func.func @transform_5(%arg0: i32, %arg1: i32) -> (i32, i32, i32) {
    %c0_i32 = arith.constant 0 : i32
    %c0_i32_0 = arith.constant 0 : i32
    %c0_i32_1 = arith.constant 0 : i32
    return %arg1, %c0_i32, %c0_i32_0 : i32, i32, i32
  }
  func.func @transform_6(%arg0: i32, %arg1: i32) -> (i32, i32, i32) {
    %c0_i32 = arith.constant 0 : i32
    %c0_i32_0 = arith.constant 0 : i32
    %c0_i32_1 = arith.constant 0 : i32
    return %arg1, %c0_i32, %c0_i32_0 : i32, i32, i32
  }
  func.func @transform_7(%arg0: i32, %arg1: i32) -> (i32, i32, i32) {
    %c0_i32 = arith.constant 0 : i32
    %c0_i32_0 = arith.constant 0 : i32
    %c0_i32_1 = arith.constant 0 : i32
    return %arg1, %c0_i32, %c0_i32_0 : i32, i32, i32
  }
  func.func @transform_8(%arg0: i32, %arg1: i32) -> (i32, i32, i32) {
    %c0_i32 = arith.constant 0 : i32
    %c0_i32_0 = arith.constant 0 : i32
    %c0_i32_1 = arith.constant 0 : i32
    return %arg1, %c0_i32, %c0_i32_0 : i32, i32, i32
  }
  func.func @transform_9(%arg0: i32, %arg1: i32) -> (i32, i32, i32) {
    %c0_i32 = arith.constant 0 : i32
    %c0_i32_0 = arith.constant 0 : i32
    %c0_i32_1 = arith.constant 0 : i32
    return %arg1, %c0_i32, %c0_i32_0 : i32, i32, i32
  }
  func.func @transform_10(%arg0: i32, %arg1: i32) -> (i32, i32, i32) {
    %c0_i32 = arith.constant 0 : i32
    %c0_i32_0 = arith.constant 0 : i32
    %c0_i32_1 = arith.constant 0 : i32
    return %arg1, %c0_i32, %c0_i32_0 : i32, i32, i32
  }
  func.func @transform_11(%arg0: i32, %arg1: i32) -> (i32, i32, i32) {
    %c0_i32 = arith.constant 0 : i32
    %c0_i32_0 = arith.constant 0 : i32
    %c0_i32_1 = arith.constant 0 : i32
    return %arg1, %c0_i32, %c0_i32_0 : i32, i32, i32
  }
  func.func @transform_12(%arg0: i32, %arg1: i32) -> (i32, i32, i32) {
    %c0_i32 = arith.constant 0 : i32
    %c0_i32_0 = arith.constant 0 : i32
    %c0_i32_1 = arith.constant 0 : i32
    return %arg1, %c0_i32, %c0_i32_0 : i32, i32, i32
  }
  func.func @transform_13(%arg0: i32, %arg1: i32) -> (i32, i32, i32) {
    %c0_i32 = arith.constant 0 : i32
    %c0_i32_0 = arith.constant 0 : i32
    %c0_i32_1 = arith.constant 0 : i32
    return %arg1, %c0_i32, %c0_i32_0 : i32, i32, i32
  }
  func.func @transform_14(%arg0: i32, %arg1: i32) -> (i32, i32, i32) {
    %c0_i32 = arith.constant 0 : i32
    %c0_i32_0 = arith.constant 0 : i32
    %c0_i32_1 = arith.constant 0 : i32
    return %arg0, %c0_i32, %c0_i32_0 : i32, i32, i32
  }
}

</mosaic_0001>

<llo_original>
// kernel: tpu_custom_call.1
$region0: #{tpu_custom_call.1}
  #allocation0 [shape = 'u32[]', space=smem, size = 0x4, offset = 0x4, fixed_abs, tag = 'smem constant byte address 0x4 - core index']
  #allocation1 [shape = 'u32[72,128]{1,0:T(1,128)}', space=vmem, size = 0x9000, scoped, tag = 'internal scratch']
  %s0 = inlined_call_operand.hbm [shape: bf16[2,8,128], index: 0, kind: input, shape index: {}]
  %s1 = inlined_call_operand.hbm [shape: f32[2,1,8], index: 1, kind: input, shape index: {}]
  %s2 = inlined_call_operand.hbm [shape: bf16[2,128,384], index: 2, kind: input, shape index: {}]
  %s3 = inlined_call_operand.hbm [shape: f32[2,1,384], index: 3, kind: input, shape index: {}]
  %s4 = inlined_call_operand.hbm [shape: bf16[2,2,64,128], index: 4, kind: input, shape index: {}]
  %s5 = inlined_call_operand.vmem [shape: f32[2,1,128], index: 5, kind: input, shape index: {}]
  %s6 = inlined_call_operand.hbm [shape: f32[2,1,128], index: 6, kind: input, shape index: {}]
  %s7 = inlined_call_operand.hbm [shape: f32[2,1,128], index: 7, kind: input, shape index: {}]
  %s8 = inlined_call_operand.hbm [shape: bf16[2,128,256], index: 8, kind: input, shape index: {}]
  %s9 = inlined_call_operand.vmem [shape: f32[2,1,256], index: 9, kind: input, shape index: {}]
  %s10 = inlined_call_operand.hbm [shape: bf16[2,256,128], index: 10, kind: input, shape index: {}]
  %s11 = inlined_call_operand.vmem [shape: f32[2,1,128], index: 11, kind: input, shape index: {}]
  %s12 = inlined_call_operand.vmem [shape: f32[2,1,128], index: 12, kind: input, shape index: {}]
  %s13 = inlined_call_operand.vmem [shape: f32[2,1,128], index: 13, kind: input, shape index: {}]
  %s14 = inlined_call_operand.hbm [shape: bf16[2,8,128], index: 14, kind: output, shape index: {}]
  %s15 = sld [smem:[#allocation0]]
  $region129: #{tpu_custom_call.1} parent=0
    _
  %s17 = ssub.s32 1, %s15
  %s18 = scalar_select 0, %s17, %s15
  $region1: #{tpu_custom_call.1} parent=0
    #allocation2 [shape = 'u8[4096]{0}', space=vmem, size = 0x1000, scoped, tag = 'input window, operand 0']
    #allocation3 [shape = 's32[2]{0}', space=sflag, size = 0x8, scoped, tag = 'scoped memory for tpu_custom_call.1']
    #allocation4 [shape = 's32[2]{0}', space=sflag, size = 0x8, scoped, tag = 'scoped memory for tpu_custom_call.1']
    #allocation5 [shape = 'u8[1024]{0}', space=vmem, size = 0x400, scoped, tag = 'input window, operand 1']
    #allocation6 [shape = 's32[2]{0}', space=sflag, size = 0x8, scoped, tag = 'scoped memory for tpu_custom_call.1']
    #allocation7 [shape = 'u8[196608]{0}', space=vmem, size = 0x30000, scoped, tag = 'input window, operand 2']
    #allocation8 [shape = 'u8[3072]{0}', space=vmem, size = 0xc00, scoped, tag = 'input window, operand 3']
    #allocation9 [shape = 's32[2]{0}', space=sflag, size = 0x8, scoped, tag = 'scoped memory for tpu_custom_call.1']
    #allocation10 [shape = 'u8[65536]{0}', space=vmem, size = 0x10000, scoped, tag = 'input window, operand 4']
    #allocation11 [shape = 'u8[1024]{0}', space=vmem, size = 0x400, scoped, tag = 'input window, operand 6']
    #allocation12 [shape = 's32[2]{0}', space=sflag, size = 0x8, scoped, tag = 'scoped memory for tpu_custom_call.1']
    #allocation13 [shape = 'u8[1024]{0}', space=vmem, size = 0x400, scoped, tag = 'input window, operand 7']
    #allocation14 [shape = 'u8[131072]{0}', space=vmem, size = 0x20000, scoped, tag = 'input window, operand 8']
    #allocation15 [shape = 's32[2]{0}', space=sflag, size = 0x8, scoped, tag = 'scoped memory for tpu_custom_call.1']
    #allocation16 [shape = 'u8[131072]{0}', space=vmem, size = 0x20000, scoped, tag = 'input window, operand 10']
    #allocation17 [shape = 'u8[4096]{0}', space=vmem, size = 0x1000, scoped, tag = 'output window, operand 0']
    %19 = vsyncpa [#allocation3], 0
    %s20 = scalar_lea.sflag [#allocation3], 1
    %21 = vsyncpa %s20, 0
    %22 = vsyncpa [#allocation6], 0
    %s23 = scalar_lea.sflag [#allocation6], 1
    %24 = vsyncpa %s23, 0
    %25 = vsyncpa [#allocation9], 0
    %s26 = scalar_lea.sflag [#allocation9], 1
    %27 = vsyncpa %s26, 0
    %28 = vsyncpa [#allocation12], 0
    %s29 = scalar_lea.sflag [#allocation12], 1
    %30 = vsyncpa %s29, 0
    %31 = vsyncpa [#allocation15], 0
    %s32 = scalar_lea.sflag [#allocation15], 1
    %33 = vsyncpa %s32, 0
    %34 = vsyncpa [#allocation4], 0
    %s35 = scalar_lea.sflag [#allocation4], 1
    %36 = vsyncpa %s35, 0
    loop: start=0, step=1, limit=6
    $region2: #{tpu_custom_call.1} parent=1 // loop_pre_header
      _
    $region3: #{tpu_custom_call.1} parent=1 // loop_header
      %s38 = sphi 0, %s42
      %p39 = scmp.ge.s32.totalorder %s38, 6
      %s45 = sphi 0, %s57
      %s46 = sphi 0, %s53
      %s47 = sphi 0, %s45
      %s48 = sphi 0, %s46
      %s49 = sphi 0, %s47
      %s50 = sphi 0, %s48
      %s60 = sphi 0, %s62
      %s63 = sphi 0, %s60
      %s64 = sphi 0, %s63
      %s80 = sphi 0, %s64
      %s86 = sphi 0, %s88
      %s89 = sphi 0, %s86
      %s90 = sphi 0, %s89
      %s106 = sphi 0, %s90
      %s112 = sphi 0, %s114
      %s115 = sphi 0, %s112
      %s116 = sphi 0, %s115
      %s132 = sphi 0, %s116
      %s138 = sphi 0, %s140
      %s141 = sphi 0, %s138
      %s142 = sphi 0, %s141
      %s158 = sphi 0, %s142
      %s164 = sphi 0, %s166
      %s167 = sphi 0, %s164
      %s168 = sphi 0, %s167
      %s184 = sphi 0, %s168
      %s190 = sphi 0, %s192
      %s193 = sphi 0, %s190
      %s194 = sphi 0, %s193
      %s210 = sphi 0, %s194
      %s216 = sphi 0, %s218
      %s219 = sphi 0, %s216
      %s220 = sphi 0, %s219
      %s236 = sphi 0, %s220
      %s242 = sphi 0, %s244
      %s245 = sphi 0, %s242
      %s246 = sphi 0, %s245
      %s262 = sphi 0, %s246
      %s268 = sphi 0, %s270
      %s271 = sphi 0, %s268
      %s272 = sphi 0, %s271
      %s288 = sphi 0, %s272
      %s294 = sphi 0, %s296
      %s297 = sphi 0, %s294
      %s298 = sphi 0, %s297
      %s314 = sphi 0, %s298
      %s320 = sphi 0, %s322
      %s323 = sphi 0, %s320
      %s324 = sphi 0, %s323
      %s340 = sphi 0, %s324
      %s346 = sphi 0, %s348
      %s349 = sphi 0, %s346
      %s350 = sphi 0, %s349
      %s366 = sphi 0, %s350
      %s372 = sphi 0, %s374
      %s375 = sphi 0, %s372
      %s376 = sphi 0, %s375
      %s392 = sphi 0, %s376
      %s398 = sphi 0, %s400
      %s401 = sphi 0, %s398
      %s402 = sphi 0, %s401
      %s418 = sphi 0, %s402
      %s424 = sphi 0, %s426
      %s427 = sphi 0, %s424
      %s428 = sphi 0, %s427
      %s444 = sphi 0, %s428
    $region4: #{tpu_custom_call.1} parent=1 // loop_header_branch
      %41 = sbr.rel (%p39) target = $region8
    $region5: #{tpu_custom_call.1} parent=1 // loop_body
      %s43 = ssub.s32 %s38, 1
      %s44 = ssub.s32 %s38, 2
      %s51 = sadd.s32 1, %s46
      %p52 = scmp.ge.s32.totalorder %s51, 2
      %s53 = scalar_select %p52, 0, %s51
      %s54 = sadd.s32 1, %s45
      %s55 = scalar_select %p52, %s54, %s45
      %p56 = scmp.ge.s32.totalorder %s55, 2
      %s57 = scalar_select %p56, 0, %s55
      %s58 = ssub.s32 %s45, %s57
      %p59 = scmp.eq.s32.totalorder %s58, 0
      %s61 = sadd.s32 %s60, 1
      %s62 = scalar_select %p59, %s60, %s61
      %p65 = pneg %p59
      %p66 = scmp.eq.s32.totalorder %s38, 3
      %p67 = por %p65, %p66
      %p68 = scmp.ne.s32.totalorder %s60, %s63
      %p69 = scmp.eq.s32.totalorder %s38, 0
      %p70 = por %p68, %p69
      %p71 = scmp.ne.s32.totalorder %s60, %s63
      %p72 = scmp.eq.s32.totalorder %s43, 3
      %p73 = por %p71, %p72
      %p74 = scmp.ne.s32.totalorder %s63, %s64
      %p75 = scmp.eq.s32.totalorder %s43, 0
      %p76 = por %p74, %p75
      %p77 = scmp.ne.s32.totalorder %s63, %s64
      %p78 = scmp.eq.s32.totalorder %s44, 3
      %p79 = por %p77, %p78
      %p81 = scmp.ne.s32.totalorder %s64, %s80
      %p82 = scmp.eq.s32.totalorder %s44, 0
      %p83 = por %p81, %p82
      %s84 = ssub.s32 %s45, %s57
      %p85 = scmp.eq.s32.totalorder %s84, 0
      %s87 = sadd.s32 %s86, 1
      %s88 = scalar_select %p85, %s86, %s87
      %p91 = pneg %p85
      %p92 = scmp.eq.s32.totalorder %s38, 3
      %p93 = por %p91, %p92
      %p94 = scmp.ne.s32.totalorder %s86, %s89
      %p95 = scmp.eq.s32.totalorder %s38, 0
      %p96 = por %p94, %p95
      %p97 = scmp.ne.s32.totalorder %s86, %s89
      %p98 = scmp.eq.s32.totalorder %s43, 3
      %p99 = por %p97, %p98
      %p100 = scmp.ne.s32.totalorder %s89, %s90
      %p101 = scmp.eq.s32.totalorder %s43, 0
      %p102 = por %p100, %p101
      %p103 = scmp.ne.s32.totalorder %s89, %s90
      %p104 = scmp.eq.s32.totalorder %s44, 3
      %p105 = por %p103, %p104
      %p107 = scmp.ne.s32.totalorder %s90, %s106
      %p108 = scmp.eq.s32.totalorder %s44, 0
      %p109 = por %p107, %p108
      %s110 = ssub.s32 %s46, %s53
      %p111 = scmp.eq.s32.totalorder %s110, 0
      %s113 = sadd.s32 %s112, 1
      %s114 = scalar_select %p111, %s112, %s113
      %p117 = pneg %p111
      %p118 = scmp.eq.s32.totalorder %s38, 3
      %p119 = por %p117, %p118
      %p120 = scmp.ne.s32.totalorder %s112, %s115
      %p121 = scmp.eq.s32.totalorder %s38, 0
      %p122 = por %p120, %p121
      %p123 = scmp.ne.s32.totalorder %s112, %s115
      %p124 = scmp.eq.s32.totalorder %s43, 3
      %p125 = por %p123, %p124
      %p126 = scmp.ne.s32.totalorder %s115, %s116
      %p127 = scmp.eq.s32.totalorder %s43, 0
      %p128 = por %p126, %p127
      %p129 = scmp.ne.s32.totalorder %s115, %s116
      %p130 = scmp.eq.s32.totalorder %s44, 3
      %p131 = por %p129, %p130
      %p133 = scmp.ne.s32.totalorder %s116, %s132
      %p134 = scmp.eq.s32.totalorder %s44, 0
      %p135 = por %p133, %p134
      %s136 = ssub.s32 %s46, %s53
      %p137 = scmp.eq.s32.totalorder %s136, 0
      %s139 = sadd.s32 %s138, 1
      %s140 = scalar_select %p137, %s138, %s139
      %p143 = pneg %p137
      %p144 = scmp.eq.s32.totalorder %s38, 3
      %p145 = por %p143, %p144
      %p146 = scmp.ne.s32.totalorder %s138, %s141
      %p147 = scmp.eq.s32.totalorder %s38, 0
      %p148 = por %p146, %p147
      %p149 = scmp.ne.s32.totalorder %s138, %s141
      %p150 = scmp.eq.s32.totalorder %s43, 3
      %p151 = por %p149, %p150
      %p152 = scmp.ne.s32.totalorder %s141, %s142
      %p153 = scmp.eq.s32.totalorder %s43, 0
      %p154 = por %p152, %p153
      %p155 = scmp.ne.s32.totalorder %s141, %s142
      %p156 = scmp.eq.s32.totalorder %s44, 3
      %p157 = por %p155, %p156
      %p159 = scmp.ne.s32.totalorder %s142, %s158
      %p160 = scmp.eq.s32.totalorder %s44, 0
      %p161 = por %p159, %p160
      %s162 = ssub.s32 %s46, %s53
      %p163 = scmp.eq.s32.totalorder %s162, 0
      %s165 = sadd.s32 %s164, 1
      %s166 = scalar_select %p163, %s164, %s165
      %p169 = pneg %p163
      %p170 = scmp.eq.s32.totalorder %s38, 3
      %p171 = por %p169, %p170
      %p172 = scmp.ne.s32.totalorder %s164, %s167
      %p173 = scmp.eq.s32.totalorder %s38, 0
      %p174 = por %p172, %p173
      %p175 = scmp.ne.s32.totalorder %s164, %s167
      %p176 = scmp.eq.s32.totalorder %s43, 3
      %p177 = por %p175, %p176
      %p178 = scmp.ne.s32.totalorder %s167, %s168
      %p179 = scmp.eq.s32.totalorder %s43, 0
      %p180 = por %p178, %p179
      %p181 = scmp.ne.s32.totalorder %s167, %s168
      %p182 = scmp.eq.s32.totalorder %s44, 3
      %p183 = por %p181, %p182
      %p185 = scmp.ne.s32.totalorder %s168, %s184
      %p186 = scmp.eq.s32.totalorder %s44, 0
      %p187 = por %p185, %p186
      %s188 = ssub.s32 %s46, %s53
      %p189 = scmp.eq.s32.totalorder %s188, 0
      %s191 = sadd.s32 %s190, 1
      %s192 = scalar_select %p189, %s190, %s191
      %p195 = pneg %p189
      %p196 = scmp.eq.s32.totalorder %s38, 3
      %p197 = por %p195, %p196
      %p198 = scmp.ne.s32.totalorder %s190, %s193
      %p199 = scmp.eq.s32.totalorder %s38, 0
      %p200 = por %p198, %p199
      %p201 = scmp.ne.s32.totalorder %s190, %s193
      %p202 = scmp.eq.s32.totalorder %s43, 3
      %p203 = por %p201, %p202
      %p204 = scmp.ne.s32.totalorder %s193, %s194
      %p205 = scmp.eq.s32.totalorder %s43, 0
      %p206 = por %p204, %p205
      %p207 = scmp.ne.s32.totalorder %s193, %s194
      %p208 = scmp.eq.s32.totalorder %s44, 3
      %p209 = por %p207, %p208
      %p211 = scmp.ne.s32.totalorder %s194, %s210
      %p212 = scmp.eq.s32.totalorder %s44, 0
      %p213 = por %p211, %p212
      %s214 = ssub.s32 %s46, %s53
      %p215 = scmp.eq.s32.totalorder %s214, 0
      %s217 = sadd.s32 %s216, 1
      %s218 = scalar_select %p215, %s216, %s217
      %p221 = pneg %p215
      %p222 = scmp.eq.s32.totalorder %s38, 3
      %p223 = por %p221, %p222
      %p224 = scmp.ne.s32.totalorder %s216, %s219
      %p225 = scmp.eq.s32.totalorder %s38, 0
      %p226 = por %p224, %p225
      %p227 = scmp.ne.s32.totalorder %s216, %s219
      %p228 = scmp.eq.s32.totalorder %s43, 3
      %p229 = por %p227, %p228
      %p230 = scmp.ne.s32.totalorder %s219, %s220
      %p231 = scmp.eq.s32.totalorder %s43, 0
      %p232 = por %p230, %p231
      %p233 = scmp.ne.s32.totalorder %s219, %s220
      %p234 = scmp.eq.s32.totalorder %s44, 3
      %p235 = por %p233, %p234
      %p237 = scmp.ne.s32.totalorder %s220, %s236
      %p238 = scmp.eq.s32.totalorder %s44, 0
      %p239 = por %p237, %p238
      %s240 = ssub.s32 %s46, %s53
      %p241 = scmp.eq.s32.totalorder %s240, 0
      %s243 = sadd.s32 %s242, 1
      %s244 = scalar_select %p241, %s242, %s243
      %p247 = pneg %p241
      %p248 = scmp.eq.s32.totalorder %s38, 3
      %p249 = por %p247, %p248
      %p250 = scmp.ne.s32.totalorder %s242, %s245
      %p251 = scmp.eq.s32.totalorder %s38, 0
      %p252 = por %p250, %p251
      %p253 = scmp.ne.s32.totalorder %s242, %s245
      %p254 = scmp.eq.s32.totalorder %s43, 3
      %p255 = por %p253, %p254
      %p256 = scmp.ne.s32.totalorder %s245, %s246
      %p257 = scmp.eq.s32.totalorder %s43, 0
      %p258 = por %p256, %p257
      %p259 = scmp.ne.s32.totalorder %s245, %s246
      %p260 = scmp.eq.s32.totalorder %s44, 3
      %p261 = por %p259, %p260
      %p263 = scmp.ne.s32.totalorder %s246, %s262
      %p264 = scmp.eq.s32.totalorder %s44, 0
      %p265 = por %p263, %p264
      %s266 = ssub.s32 %s46, %s53
      %p267 = scmp.eq.s32.totalorder %s266, 0
      %s269 = sadd.s32 %s268, 1
      %s270 = scalar_select %p267, %s268, %s269
      %p273 = pneg %p267
      %p274 = scmp.eq.s32.totalorder %s38, 3
      %p275 = por %p273, %p274
      %p276 = scmp.ne.s32.totalorder %s268, %s271
      %p277 = scmp.eq.s32.totalorder %s38, 0
      %p278 = por %p276, %p277
      %p279 = scmp.ne.s32.totalorder %s268, %s271
      %p280 = scmp.eq.s32.totalorder %s43, 3
      %p281 = por %p279, %p280
      %p282 = scmp.ne.s32.totalorder %s271, %s272
      %p283 = scmp.eq.s32.totalorder %s43, 0
      %p284 = por %p282, %p283
      %p285 = scmp.ne.s32.totalorder %s271, %s272
      %p286 = scmp.eq.s32.totalorder %s44, 3
      %p287 = por %p285, %p286
      %p289 = scmp.ne.s32.totalorder %s272, %s288
      %p290 = scmp.eq.s32.totalorder %s44, 0
      %p291 = por %p289, %p290
      %s292 = ssub.s32 %s46, %s53
      %p293 = scmp.eq.s32.totalorder %s292, 0
      %s295 = sadd.s32 %s294, 1
      %s296 = scalar_select %p293, %s294, %s295
      %p299 = pneg %p293
      %p300 = scmp.eq.s32.totalorder %s38, 3
      %p301 = por %p299, %p300
      %p302 = scmp.ne.s32.totalorder %s294, %s297
      %p303 = scmp.eq.s32.totalorder %s38, 0
      %p304 = por %p302, %p303
      %p305 = scmp.ne.s32.totalorder %s294, %s297
      %p306 = scmp.eq.s32.totalorder %s43, 3
      %p307 = por %p305, %p306
      %p308 = scmp.ne.s32.totalorder %s297, %s298
      %p309 = scmp.eq.s32.totalorder %s43, 0
      %p310 = por %p308, %p309
      %p311 = scmp.ne.s32.totalorder %s297, %s298
      %p312 = scmp.eq.s32.totalorder %s44, 3
      %p313 = por %p311, %p312
      %p315 = scmp.ne.s32.totalorder %s298, %s314
      %p316 = scmp.eq.s32.totalorder %s44, 0
      %p317 = por %p315, %p316
      %s318 = ssub.s32 %s46, %s53
      %p319 = scmp.eq.s32.totalorder %s318, 0
      %s321 = sadd.s32 %s320, 1
      %s322 = scalar_select %p319, %s320, %s321
      %p325 = pneg %p319
      %p326 = scmp.eq.s32.totalorder %s38, 3
      %p327 = por %p325, %p326
      %p328 = scmp.ne.s32.totalorder %s320, %s323
      %p329 = scmp.eq.s32.totalorder %s38, 0
      %p330 = por %p328, %p329
      %p331 = scmp.ne.s32.totalorder %s320, %s323
      %p332 = scmp.eq.s32.totalorder %s43, 3
      %p333 = por %p331, %p332
      %p334 = scmp.ne.s32.totalorder %s323, %s324
      %p335 = scmp.eq.s32.totalorder %s43, 0
      %p336 = por %p334, %p335
      %p337 = scmp.ne.s32.totalorder %s323, %s324
      %p338 = scmp.eq.s32.totalorder %s44, 3
      %p339 = por %p337, %p338
      %p341 = scmp.ne.s32.totalorder %s324, %s340
      %p342 = scmp.eq.s32.totalorder %s44, 0
      %p343 = por %p341, %p342
      %s344 = ssub.s32 %s46, %s53
      %p345 = scmp.eq.s32.totalorder %s344, 0
      %s347 = sadd.s32 %s346, 1
      %s348 = scalar_select %p345, %s346, %s347
      %p351 = pneg %p345
      %p352 = scmp.eq.s32.totalorder %s38, 3
      %p353 = por %p351, %p352
      %p354 = scmp.ne.s32.totalorder %s346, %s349
      %p355 = scmp.eq.s32.totalorder %s38, 0
      %p356 = por %p354, %p355
      %p357 = scmp.ne.s32.totalorder %s346, %s349
      %p358 = scmp.eq.s32.totalorder %s43, 3
      %p359 = por %p357, %p358
      %p360 = scmp.ne.s32.totalorder %s349, %s350
      %p361 = scmp.eq.s32.totalorder %s43, 0
      %p362 = por %p360, %p361
      %p363 = scmp.ne.s32.totalorder %s349, %s350
      %p364 = scmp.eq.s32.totalorder %s44, 3
      %p365 = por %p363, %p364
      %p367 = scmp.ne.s32.totalorder %s350, %s366
      %p368 = scmp.eq.s32.totalorder %s44, 0
      %p369 = por %p367, %p368
      %s370 = ssub.s32 %s46, %s53
      %p371 = scmp.eq.s32.totalorder %s370, 0
      %s373 = sadd.s32 %s372, 1
      %s374 = scalar_select %p371, %s372, %s373
      %p377 = pneg %p371
      %p378 = scmp.eq.s32.totalorder %s38, 3
      %p379 = por %p377, %p378
      %p380 = scmp.ne.s32.totalorder %s372, %s375
      %p381 = scmp.eq.s32.totalorder %s38, 0
      %p382 = por %p380, %p381
      %p383 = scmp.ne.s32.totalorder %s372, %s375
      %p384 = scmp.eq.s32.totalorder %s43, 3
      %p385 = por %p383, %p384
      %p386 = scmp.ne.s32.totalorder %s375, %s376
      %p387 = scmp.eq.s32.totalorder %s43, 0
      %p388 = por %p386, %p387
      %p389 = scmp.ne.s32.totalorder %s375, %s376
      %p390 = scmp.eq.s32.totalorder %s44, 3
      %p391 = por %p389, %p390
      %p393 = scmp.ne.s32.totalorder %s376, %s392
      %p394 = scmp.eq.s32.totalorder %s44, 0
      %p395 = por %p393, %p394
      %s396 = ssub.s32 %s46, %s53
      %p397 = scmp.eq.s32.totalorder %s396, 0
      %s399 = sadd.s32 %s398, 1
      %s400 = scalar_select %p397, %s398, %s399
      %p403 = pneg %p397
      %p404 = scmp.eq.s32.totalorder %s38, 3
      %p405 = por %p403, %p404
      %p406 = scmp.ne.s32.totalorder %s398, %s401
      %p407 = scmp.eq.s32.totalorder %s38, 0
      %p408 = por %p406, %p407
      %p409 = scmp.ne.s32.totalorder %s398, %s401
      %p410 = scmp.eq.s32.totalorder %s43, 3
      %p411 = por %p409, %p410
      %p412 = scmp.ne.s32.totalorder %s401, %s402
      %p413 = scmp.eq.s32.totalorder %s43, 0
      %p414 = por %p412, %p413
      %p415 = scmp.ne.s32.totalorder %s401, %s402
      %p416 = scmp.eq.s32.totalorder %s44, 3
      %p417 = por %p415, %p416
      %p419 = scmp.ne.s32.totalorder %s402, %s418
      %p420 = scmp.eq.s32.totalorder %s44, 0
      %p421 = por %p419, %p420
      %s422 = ssub.s32 %s45, %s57
      %p423 = scmp.eq.s32.totalorder %s422, 0
      %s425 = sadd.s32 %s424, 1
      %s426 = scalar_select %p423, %s424, %s425
      %p429 = pneg %p423
      %p430 = scmp.eq.s32.totalorder %s38, 3
      %p431 = por %p429, %p430
      %p432 = scmp.ne.s32.totalorder %s424, %s427
      %p433 = scmp.eq.s32.totalorder %s38, 0
      %p434 = por %p432, %p433
      %p435 = scmp.ne.s32.totalorder %s424, %s427
      %p436 = scmp.eq.s32.totalorder %s43, 3
      %p437 = por %p435, %p436
      %p438 = scmp.ne.s32.totalorder %s427, %s428
      %p439 = scmp.eq.s32.totalorder %s43, 0
      %p440 = por %p438, %p439
      %p441 = scmp.ne.s32.totalorder %s427, %s428
      %p442 = scmp.eq.s32.totalorder %s44, 3
      %p443 = por %p441, %p442
      %p445 = scmp.ne.s32.totalorder %s428, %s444
      %p446 = scmp.eq.s32.totalorder %s44, 0
      %p447 = por %p445, %p446
      %p448 = scmp.le.s32.totalorder 1, %s38
      %p449 = scmp.lt.s32.totalorder %s38, 5
      %p450 = pnand %p448, %p449
      %p451 = pneg %p450
      // Predicated region
      $region9: #{tpu_custom_call.1} parent=5 // pred_check
        _
      $region10: #{tpu_custom_call.1} parent=5 // pred_check_branch
        %453 = sbr.rel (%p450) target = $region12
      $region11: #{tpu_custom_call.1} parent=5 // pred_region
        %s454 = ssub.s32 %s38, 1
      $region12: #{tpu_custom_call.1} parent=5 // pred_fallthru
        _
      %p455 = scmp.lt.s32.totalorder %s38, 4
      // Predicated region
      $region13: #{tpu_custom_call.1} parent=5 // pred_check
        %p456 = pneg %p455
      $region14: #{tpu_custom_call.1} parent=5 // pred_check_branch
        %458 = sbr.rel (%p456) target = $region16
      $region15: #{tpu_custom_call.1} parent=5 // pred_region
        // Predicated region
        $region17: #{tpu_custom_call.1} parent=15 // pred_check
          %p459 = pneg %p70
        $region18: #{tpu_custom_call.1} parent=15 // pred_check_branch
          %461 = sbr.rel (%p459) target = $region20
        $region19: #{tpu_custom_call.1} parent=15 // pred_region
          %s462 = sand.u32 %s60, 1
          %s463 = scalar_lea.sflag [#allocation3], %s462
          %s464 = sand.u32 %s60, 1
          %s465 = smul.addr %s464, 4
          %s466 = scalar_lea.vmem [#allocation2], %s465
          %468 = vsyncadd %s463, 0
          %s469 = smul.addr %s45, 4
          %s470 = scalar_lea.hbm %s0, %s469
          %s472 = sshll.u32 %s470, 4
          %s473 = int_to_ptr.hbm [resolvable:$true] %s472
          %s474 = sshll.u32 %s466, 4
          %s475 = int_to_ptr.vmem [resolvable:$true] %s474
          %477 = dma.hbm_to_vmem [thread:$0]  %s473, 64, %s475, %s463
        $region20: #{tpu_custom_call.1} parent=15 // pred_fallthru
          _
        // Predicated region
        $region21: #{tpu_custom_call.1} parent=15 // pred_check
          %p478 = pneg %p96
        $region22: #{tpu_custom_call.1} parent=15 // pred_check_branch
          %480 = sbr.rel (%p478) target = $region24
        $region23: #{tpu_custom_call.1} parent=15 // pred_region
          %s481 = sand.u32 %s38, 1
          %s482 = scalar_lea.sflag [#allocation6], %s481
          %s483 = sand.u32 %s86, 1
          %s484 = scalar_lea.vmem [#allocation5], %s483
          %486 = vsyncadd %s482, 0
          %s487 = scalar_lea.hbm %s1, %s45
          %s489 = sshll.u32 %s487, 4
          %s490 = int_to_ptr.hbm [resolvable:$true] %s489
          %s491 = sshll.u32 %s484, 4
          %s492 = int_to_ptr.vmem [resolvable:$true] %s491
          %494 = dma.hbm_to_vmem [thread:$0]  %s490, 16, %s492, %s482
        $region24: #{tpu_custom_call.1} parent=15 // pred_fallthru
          _
        // Predicated region
        $region25: #{tpu_custom_call.1} parent=15 // pred_check
          %p495 = pneg %p122
        $region26: #{tpu_custom_call.1} parent=15 // pred_check_branch
          %497 = sbr.rel (%p495) target = $region28
        $region27: #{tpu_custom_call.1} parent=15 // pred_region
          %s498 = sand.u32 %s38, 1
          %s499 = scalar_lea.sflag [#allocation6], %s498
          %s500 = sand.u32 %s112, 1
          %s501 = smul.addr %s500, 192
          %s502 = scalar_lea.vmem [#allocation7], %s501
          %504 = vsyncadd %s499, 0
          %s505 = smul.addr %s46, 48
          %s506 = smul.addr %s505, 4
          %s507 = scalar_lea.hbm %s2, %s506
          %s508 = sshll.u32 %s507, 4
          %s509 = int_to_ptr.hbm [resolvable:$true] %s508
          %s510 = sshll.u32 %s502, 4
          %s511 = int_to_ptr.vmem [resolvable:$true] %s510
          %516 = dma.hbm_to_vmem [thread:$0]  %s509, 3072, %s511, %s499, 192, 192, 12
        $region28: #{tpu_custom_call.1} parent=15 // pred_fallthru
          _
        // Predicated region
        $region29: #{tpu_custom_call.1} parent=15 // pred_check
          %p517 = pneg %p148
        $region30: #{tpu_custom_call.1} parent=15 // pred_check_branch
          %519 = sbr.rel (%p517) target = $region32
        $region31: #{tpu_custom_call.1} parent=15 // pred_region
          %s520 = sand.u32 %s38, 1
          %s521 = scalar_lea.sflag [#allocation9], %s520
          %s522 = sand.u32 %s138, 1
          %s523 = smul.addr %s522, 3
          %s524 = scalar_lea.vmem [#allocation8], %s523
          %526 = vsyncadd %s521, 0
          %s527 = smul.addr %s46, 3
          %s528 = scalar_lea.hbm %s3, %s527
          %s530 = sshll.u32 %s528, 4
          %s531 = int_to_ptr.hbm [resolvable:$true] %s530
          %s532 = sshll.u32 %s524, 4
          %s533 = int_to_ptr.vmem [resolvable:$true] %s532
          %535 = dma.hbm_to_vmem [thread:$0]  %s531, 48, %s533, %s521
        $region32: #{tpu_custom_call.1} parent=15 // pred_fallthru
          _
        // Predicated region
        $region33: #{tpu_custom_call.1} parent=15 // pred_check
          %p536 = pneg %p174
        $region34: #{tpu_custom_call.1} parent=15 // pred_check_branch
          %538 = sbr.rel (%p536) target = $region36
        $region35: #{tpu_custom_call.1} parent=15 // pred_region
          %s539 = sand.u32 %s38, 1
          %s540 = scalar_lea.sflag [#allocation9], %s539
          %s541 = sand.u32 %s164, 1
          %s542 = smul.addr %s541, 64
          %s543 = scalar_lea.vmem [#allocation10], %s542
          %545 = vsyncadd %s540, 0
          %s546 = smul.addr %s46, 16
          %s547 = smul.addr %s546, 4
          %s548 = scalar_lea.hbm %s4, %s547
          %s549 = sshll.u32 %s548, 4
          %s550 = int_to_ptr.hbm [resolvable:$true] %s549
          %s551 = sshll.u32 %s543, 4
          %s552 = int_to_ptr.vmem [resolvable:$true] %s551
          %557 = dma.hbm_to_vmem [thread:$0]  %s550, 1024, %s552, %s540, 64, 64, 4
        $region36: #{tpu_custom_call.1} parent=15 // pred_fallthru
          _
        // Predicated region
        $region37: #{tpu_custom_call.1} parent=15 // pred_check
          %p558 = pneg %p200
        $region38: #{tpu_custom_call.1} parent=15 // pred_check_branch
          %560 = sbr.rel (%p558) target = $region40
        $region39: #{tpu_custom_call.1} parent=15 // pred_region
          %p561 = scmp.lt.s32.totalorder %s46, 1
          %s562 = scalar_select %p561, %s46, 1
          %s563 = scalar_lea.vmem %s5, %s562
        $region40: #{tpu_custom_call.1} parent=15 // pred_fallthru
          _
        // Predicated region
        $region41: #{tpu_custom_call.1} parent=15 // pred_check
          %p564 = pneg %p226
        $region42: #{tpu_custom_call.1} parent=15 // pred_check_branch
          %566 = sbr.rel (%p564) target = $region44
        $region43: #{tpu_custom_call.1} parent=15 // pred_region
          %s567 = sand.u32 %s38, 1
          %s568 = scalar_lea.sflag [#allocation12], %s567
          %s569 = sand.u32 %s216, 1
          %s570 = scalar_lea.vmem [#allocation11], %s569
          %572 = vsyncadd %s568, 0
          %s573 = scalar_lea.hbm %s6, %s46
          %s575 = sshll.u32 %s573, 4
          %s576 = int_to_ptr.hbm [resolvable:$true] %s575
          %s577 = sshll.u32 %s570, 4
          %s578 = int_to_ptr.vmem [resolvable:$true] %s577
          %580 = dma.hbm_to_vmem [thread:$0]  %s576, 16, %s578, %s568
        $region44: #{tpu_custom_call.1} parent=15 // pred_fallthru
          _
        // Predicated region
        $region45: #{tpu_custom_call.1} parent=15 // pred_check
          %p581 = pneg %p252
        $region46: #{tpu_custom_call.1} parent=15 // pred_check_branch
          %583 = sbr.rel (%p581) target = $region48
        $region47: #{tpu_custom_call.1} parent=15 // pred_region
          %s584 = sand.u32 %s38, 1
          %s585 = scalar_lea.sflag [#allocation12], %s584
          %s586 = sand.u32 %s242, 1
          %s587 = scalar_lea.vmem [#allocation13], %s586
          %589 = vsyncadd %s585, 0
          %s590 = scalar_lea.hbm %s7, %s46
          %s592 = sshll.u32 %s590, 4
          %s593 = int_to_ptr.hbm [resolvable:$true] %s592
          %s594 = sshll.u32 %s587, 4
          %s595 = int_to_ptr.vmem [resolvable:$true] %s594
          %597 = dma.hbm_to_vmem [thread:$0]  %s593, 16, %s595, %s585
        $region48: #{tpu_custom_call.1} parent=15 // pred_fallthru
          _
        // Predicated region
        $region49: #{tpu_custom_call.1} parent=15 // pred_check
          %p598 = pneg %p278
        $region50: #{tpu_custom_call.1} parent=15 // pred_check_branch
          %600 = sbr.rel (%p598) target = $region52
        $region51: #{tpu_custom_call.1} parent=15 // pred_region
          %s601 = sand.u32 %s38, 1
          %s602 = scalar_lea.sflag [#allocation15], %s601
          %s603 = sand.u32 %s268, 1
          %s604 = smul.addr %s603, 128
          %s605 = scalar_lea.vmem [#allocation14], %s604
          %607 = vsyncadd %s602, 0
          %s608 = smul.addr %s46, 32
          %s609 = smul.addr %s608, 4
          %s610 = scalar_lea.hbm %s8, %s609
          %s611 = sshll.u32 %s610, 4
          %s612 = int_to_ptr.hbm [resolvable:$true] %s611
          %s613 = sshll.u32 %s605, 4
          %s614 = int_to_ptr.vmem [resolvable:$true] %s613
          %619 = dma.hbm_to_vmem [thread:$0]  %s612, 2048, %s614, %s602, 128, 128, 8
        $region52: #{tpu_custom_call.1} parent=15 // pred_fallthru
          _
        // Predicated region
        $region53: #{tpu_custom_call.1} parent=15 // pred_check
          %p620 = pneg %p304
        $region54: #{tpu_custom_call.1} parent=15 // pred_check_branch
          %622 = sbr.rel (%p620) target = $region56
        $region55: #{tpu_custom_call.1} parent=15 // pred_region
          %p623 = scmp.lt.s32.totalorder %s46, 1
          %s624 = scalar_select %p623, %s46, 1
          %s625 = smul.addr %s624, 2
          %s626 = scalar_lea.vmem %s9, %s625
        $region56: #{tpu_custom_call.1} parent=15 // pred_fallthru
          _
        // Predicated region
        $region57: #{tpu_custom_call.1} parent=15 // pred_check
          %p627 = pneg %p330
        $region58: #{tpu_custom_call.1} parent=15 // pred_check_branch
          %629 = sbr.rel (%p627) target = $region60
        $region59: #{tpu_custom_call.1} parent=15 // pred_region
          %s630 = sand.u32 %s38, 1
          %s631 = scalar_lea.sflag [#allocation15], %s630
          %s632 = sand.u32 %s320, 1
          %s633 = smul.addr %s632, 128
          %s634 = scalar_lea.vmem [#allocation16], %s633
          %636 = vsyncadd %s631, 0
          %s637 = smul.addr %s46, 32
          %s638 = smul.addr %s637, 4
          %s639 = scalar_lea.hbm %s10, %s638
          %s640 = sshll.u32 %s639, 4
          %s641 = int_to_ptr.hbm [resolvable:$true] %s640
          %s642 = sshll.u32 %s634, 4
          %s643 = int_to_ptr.vmem [resolvable:$true] %s642
          %648 = dma.hbm_to_vmem [thread:$0]  %s641, 2048, %s643, %s631, 64, 64, 4
        $region60: #{tpu_custom_call.1} parent=15 // pred_fallthru
          _
        // Predicated region
        $region61: #{tpu_custom_call.1} parent=15 // pred_check
          %p649 = pneg %p356
        $region62: #{tpu_custom_call.1} parent=15 // pred_check_branch
          %651 = sbr.rel (%p649) target = $region64
        $region63: #{tpu_custom_call.1} parent=15 // pred_region
          %p652 = scmp.lt.s32.totalorder %s46, 1
          %s653 = scalar_select %p652, %s46, 1
          %s654 = scalar_lea.vmem %s11, %s653
        $region64: #{tpu_custom_call.1} parent=15 // pred_fallthru
          _
        // Predicated region
        $region65: #{tpu_custom_call.1} parent=15 // pred_check
          %p655 = pneg %p382
        $region66: #{tpu_custom_call.1} parent=15 // pred_check_branch
          %657 = sbr.rel (%p655) target = $region68
        $region67: #{tpu_custom_call.1} parent=15 // pred_region
          %p658 = scmp.lt.s32.totalorder %s46, 1
          %s659 = scalar_select %p658, %s46, 1
          %s660 = scalar_lea.vmem %s12, %s659
        $region68: #{tpu_custom_call.1} parent=15 // pred_fallthru
          _
        // Predicated region
        $region69: #{tpu_custom_call.1} parent=15 // pred_check
          %p661 = pneg %p408
        $region70: #{tpu_custom_call.1} parent=15 // pred_check_branch
          %663 = sbr.rel (%p661) target = $region72
        $region71: #{tpu_custom_call.1} parent=15 // pred_region
          %p664 = scmp.lt.s32.totalorder %s46, 1
          %s665 = scalar_select %p664, %s46, 1
          %s666 = scalar_lea.vmem %s13, %s665
        $region72: #{tpu_custom_call.1} parent=15 // pred_fallthru
          _
      $region16: #{tpu_custom_call.1} parent=5 // pred_fallthru
        _
      %p667 = scmp.le.s32.totalorder 1, %s38
      %p668 = scmp.lt.s32.totalorder %s38, 5
      %p669 = pnand %p667, %p668
      %p670 = pneg %p669
      // Predicated region
      $region73: #{tpu_custom_call.1} parent=5 // pred_check
        _
      $region74: #{tpu_custom_call.1} parent=5 // pred_check_branch
        %672 = sbr.rel (%p669) target = $region76
      $region75: #{tpu_custom_call.1} parent=5 // pred_region
        %s673 = ssub.s32 %s38, 1
        %s674 = sand.u32 %s63, 1
        %s675 = scalar_lea.sflag [#allocation3], %s674
        %s676 = sand.u32 %s63, 1
        %s677 = smul.addr %s676, 4
        %s678 = scalar_lea.vmem [#allocation2], %s677
        // Predicated region
        $region77: #{tpu_custom_call.1} parent=75 // pred_check
          %p679 = pneg %p76
        $region78: #{tpu_custom_call.1} parent=75 // pred_check_branch
          %681 = sbr.rel (%p679) target = $region80
        $region79: #{tpu_custom_call.1} parent=75 // pred_region
          %683 = dma.done %s675, 64
        $region80: #{tpu_custom_call.1} parent=75 // pred_fallthru
          _
        %s684 = sand.u32 %s43, 1
        %s685 = scalar_lea.sflag [#allocation6], %s684
        %s686 = sand.u32 %s89, 1
        %s687 = scalar_lea.vmem [#allocation5], %s686
        // Predicated region
        $region81: #{tpu_custom_call.1} parent=75 // pred_check
          %p688 = pneg %p102
        $region82: #{tpu_custom_call.1} parent=75 // pred_check_branch
          %690 = sbr.rel (%p688) target = $region84
        $region83: #{tpu_custom_call.1} parent=75 // pred_region
          %692 = dma.done %s685, 16
        $region84: #{tpu_custom_call.1} parent=75 // pred_fallthru
          _
        %s693 = sand.u32 %s43, 1
        %s694 = scalar_lea.sflag [#allocation6], %s693
        %s695 = sand.u32 %s115, 1
        %s696 = smul.addr %s695, 192
        %s697 = scalar_lea.vmem [#allocation7], %s696
        // Predicated region
        $region85: #{tpu_custom_call.1} parent=75 // pred_check
          %p698 = pneg %p128
        $region86: #{tpu_custom_call.1} parent=75 // pred_check_branch
          %700 = sbr.rel (%p698) target = $region88
        $region87: #{tpu_custom_call.1} parent=75 // pred_region
          %702 = dma.done %s694, 3072
        $region88: #{tpu_custom_call.1} parent=75 // pred_fallthru
          _
        %s703 = sand.u32 %s43, 1
        %s704 = scalar_lea.sflag [#allocation9], %s703
        %s705 = sand.u32 %s141, 1
        %s706 = smul.addr %s705, 3
        %s707 = scalar_lea.vmem [#allocation8], %s706
        // Predicated region
        $region89: #{tpu_custom_call.1} parent=75 // pred_check
          %p708 = pneg %p154
        $region90: #{tpu_custom_call.1} parent=75 // pred_check_branch
          %710 = sbr.rel (%p708) target = $region92
        $region91: #{tpu_custom_call.1} parent=75 // pred_region
          %712 = dma.done %s704, 48
        $region92: #{tpu_custom_call.1} parent=75 // pred_fallthru
          _
        %s713 = sand.u32 %s43, 1
        %s714 = scalar_lea.sflag [#allocation9], %s713
        %s715 = sand.u32 %s167, 1
        %s716 = smul.addr %s715, 64
        %s717 = scalar_lea.vmem [#allocation10], %s716
        // Predicated region
        $region93: #{tpu_custom_call.1} parent=75 // pred_check
          %p718 = pneg %p180
        $region94: #{tpu_custom_call.1} parent=75 // pred_check_branch
          %720 = sbr.rel (%p718) target = $region96
        $region95: #{tpu_custom_call.1} parent=75 // pred_region
          %722 = dma.done %s714, 1024
        $region96: #{tpu_custom_call.1} parent=75 // pred_fallthru
          _
        %s723 = sand.u32 %s43, 1
        %s724 = scalar_lea.sflag [#allocation12], %s723
        %s725 = sand.u32 %s219, 1
        %s726 = scalar_lea.vmem [#allocation11], %s725
        // Predicated region
        $region97: #{tpu_custom_call.1} parent=75 // pred_check
          %p727 = pneg %p232
        $region98: #{tpu_custom_call.1} parent=75 // pred_check_branch
          %729 = sbr.rel (%p727) target = $region100
        $region99: #{tpu_custom_call.1} parent=75 // pred_region
          %731 = dma.done %s724, 16
        $region100: #{tpu_custom_call.1} parent=75 // pred_fallthru
          _
        %s732 = sand.u32 %s43, 1
        %s733 = scalar_lea.sflag [#allocation12], %s732
        %s734 = sand.u32 %s245, 1
        %s735 = scalar_lea.vmem [#allocation13], %s734
        // Predicated region
        $region101: #{tpu_custom_call.1} parent=75 // pred_check
          %p736 = pneg %p258
        $region102: #{tpu_custom_call.1} parent=75 // pred_check_branch
          %738 = sbr.rel (%p736) target = $region104
        $region103: #{tpu_custom_call.1} parent=75 // pred_region
          %740 = dma.done %s733, 16
        $region104: #{tpu_custom_call.1} parent=75 // pred_fallthru
          _
        %s741 = sand.u32 %s43, 1
        %s742 = scalar_lea.sflag [#allocation15], %s741
        %s743 = sand.u32 %s271, 1
        %s744 = smul.addr %s743, 128
        %s745 = scalar_lea.vmem [#allocation14], %s744
        // Predicated region
        $region105: #{tpu_custom_call.1} parent=75 // pred_check
          %p746 = pneg %p284
        $region106: #{tpu_custom_call.1} parent=75 // pred_check_branch
          %748 = sbr.rel (%p746) target = $region108
        $region107: #{tpu_custom_call.1} parent=75 // pred_region
          %750 = dma.done %s742, 2048
        $region108: #{tpu_custom_call.1} parent=75 // pred_fallthru
          _
        %s751 = sand.u32 %s43, 1
        %s752 = scalar_lea.sflag [#allocation15], %s751
        %s753 = sand.u32 %s323, 1
        %s754 = smul.addr %s753, 128
        %s755 = scalar_lea.vmem [#allocation16], %s754
        // Predicated region
        $region109: #{tpu_custom_call.1} parent=75 // pred_check
          %p756 = pneg %p336
        $region110: #{tpu_custom_call.1} parent=75 // pred_check_branch
          %758 = sbr.rel (%p756) target = $region112
        $region111: #{tpu_custom_call.1} parent=75 // pred_region
          %760 = dma.done %s752, 2048
        $region112: #{tpu_custom_call.1} parent=75 // pred_fallthru
          _
        %s761 = sand.u32 %s63, 1
        %s762 = scalar_lea.sflag [#allocation3], %s761
        %s763 = sand.u32 %s63, 1
        %s764 = smul.addr %s763, 4
        %s765 = scalar_lea.vmem [#allocation2], %s764
        %p766 = pneg %p76
        %p767 = pneg %p73
        %s768 = sand.u32 %s43, 1
        %s769 = scalar_lea.sflag [#allocation6], %s768
        %s770 = sand.u32 %s89, 1
        %s771 = scalar_lea.vmem [#allocation5], %s770
        %p772 = pneg %p102
        %p773 = pneg %p99
        %s774 = sand.u32 %s43, 1
        %s775 = scalar_lea.sflag [#allocation6], %s774
        %s776 = sand.u32 %s115, 1
        %s777 = smul.addr %s776, 192
        %s778 = scalar_lea.vmem [#allocation7], %s777
        %p779 = pneg %p128
        %p780 = pneg %p125
        %s781 = sand.u32 %s43, 1
        %s782 = scalar_lea.sflag [#allocation9], %s781
        %s783 = sand.u32 %s141, 1
        %s784 = smul.addr %s783, 3
        %s785 = scalar_lea.vmem [#allocation8], %s784
        %p786 = pneg %p154
        %p787 = pneg %p151
        %s788 = sand.u32 %s43, 1
        %s789 = scalar_lea.sflag [#allocation9], %s788
        %s790 = sand.u32 %s167, 1
        %s791 = smul.addr %s790, 64
        %s792 = scalar_lea.vmem [#allocation10], %s791
        %p793 = pneg %p180
        %p794 = pneg %p177
        %p795 = scmp.lt.s32.totalorder %s48, 1
        %s796 = scalar_select %p795, %s48, 1
        %s797 = scalar_lea.vmem %s5, %s796
        %p798 = pneg %p206
        %p799 = pneg %p203
        %s800 = sand.u32 %s43, 1
        %s801 = scalar_lea.sflag [#allocation12], %s800
        %s802 = sand.u32 %s219, 1
        %s803 = scalar_lea.vmem [#allocation11], %s802
        %p804 = pneg %p232
        %p805 = pneg %p229
        %s806 = sand.u32 %s43, 1
        %s807 = scalar_lea.sflag [#allocation12], %s806
        %s808 = sand.u32 %s245, 1
        %s809 = scalar_lea.vmem [#allocation13], %s808
        %p810 = pneg %p258
        %p811 = pneg %p255
        %s812 = sand.u32 %s43, 1
        %s813 = scalar_lea.sflag [#allocation15], %s812
        %s814 = sand.u32 %s271, 1
        %s815 = smul.addr %s814, 128
        %s816 = scalar_lea.vmem [#allocation14], %s815
        %p817 = pneg %p284
        %p818 = pneg %p281
        %p819 = scmp.lt.s32.totalorder %s48, 1
        %s820 = scalar_select %p819, %s48, 1
        %s821 = smul.addr %s820, 2
        %s822 = scalar_lea.vmem %s9, %s821
        %p823 = pneg %p310
        %p824 = pneg %p307
        %s825 = sand.u32 %s43, 1
        %s826 = scalar_lea.sflag [#allocation15], %s825
        %s827 = sand.u32 %s323, 1
        %s828 = smul.addr %s827, 128
        %s829 = scalar_lea.vmem [#allocation16], %s828
        %p830 = pneg %p336
        %p831 = pneg %p333
        %p832 = scmp.lt.s32.totalorder %s48, 1
        %s833 = scalar_select %p832, %s48, 1
        %s834 = scalar_lea.vmem %s11, %s833
        %p835 = pneg %p362
        %p836 = pneg %p359
        %p837 = scmp.lt.s32.totalorder %s48, 1
        %s838 = scalar_select %p837, %s48, 1
        %s839 = scalar_lea.vmem %s12, %s838
        %p840 = pneg %p388
        %p841 = pneg %p385
        %p842 = scmp.lt.s32.totalorder %s48, 1
        %s843 = scalar_select %p842, %s48, 1
        %s844 = scalar_lea.vmem %s13, %s843
        %p845 = pneg %p414
        %p846 = pneg %p411
        %p847 = pneg %p440
        %p848 = pneg %p437
        %s849 = sand.u32 %s427, 1
        %s850 = scalar_lea.sflag [#allocation4], %s849
        %s851 = sand.u32 %s427, 1
        %s852 = smul.addr %s851, 4
        %s853 = scalar_lea.vmem [#allocation17], %s852
        %p854 = scmp.lt.s32.totalorder %s48, 1
        %s855 = scalar_select %p854, %s48, 1
        %s856 = scalar_lea.vmem %s5, %s855
        %p857 = scmp.lt.s32.totalorder %s48, 1
        %s858 = scalar_select %p857, %s48, 1
        %s859 = smul.addr %s858, 2
        %s860 = scalar_lea.vmem %s9, %s859
        %p861 = scmp.lt.s32.totalorder %s48, 1
        %s862 = scalar_select %p861, %s48, 1
        %s863 = scalar_lea.vmem %s11, %s862
        %p864 = scmp.lt.s32.totalorder %s48, 1
        %s865 = scalar_select %p864, %s48, 1
        %s866 = scalar_lea.vmem %s12, %s865
        %p867 = scmp.lt.s32.totalorder %s48, 1
        %s868 = scalar_select %p867, %s48, 1
        %s869 = scalar_lea.vmem %s13, %s868
        %p871 = scmp.eq.s32.totalorder %s48, 0
        // Predicated region
        $region113: #{tpu_custom_call.1} parent=75 // pred_check
          %p872 = pneg %p871
        $region114: #{tpu_custom_call.1} parent=75 // pred_check_branch
          %874 = sbr.rel (%p872) target = $region116
        $region115: #{tpu_custom_call.1} parent=75 // pred_region
          %v875 = vld [vmem:[%s678] sm:$0xf]
          %876 = vst [vmem:[%s853] sm:$0xf] %v875
        $region116: #{tpu_custom_call.1} parent=75 // pred_fallthru
          _
        %v877 = vld [vmem:[%s853] sm:$0xf]
        %v878 = vunpack.c.l.bf16 %v877
        %v879 = vld [vmem:[%s697] sm:$0xff]
        %v880 = vld [vmem:[%s697 + $0x8] sm:$0xf]
        %v881 = vld [vmem:[%s697 + $0xc] sm:$0xff]
        %v882 = vld [vmem:[%s697 + $0x14] sm:$0xf]
        %v883 = vld [vmem:[%s697 + $0x18] sm:$0xff]
        %v884 = vld [vmem:[%s697 + $0x20] sm:$0xf]
        %v885 = vld [vmem:[%s697 + $0x24] sm:$0xff]
        %v886 = vld [vmem:[%s697 + $0x2c] sm:$0xf]
        %v887 = vld [vmem:[%s697 + $0x30] sm:$0xff]
        %v888 = vld [vmem:[%s697 + $0x38] sm:$0xf]
        %v889 = vld [vmem:[%s697 + $0x3c] sm:$0xff]
        %v890 = vld [vmem:[%s697 + $0x44] sm:$0xf]
        %v891 = vld [vmem:[%s697 + $0x48] sm:$0xff]
        %v892 = vld [vmem:[%s697 + $0x50] sm:$0xf]
        %v893 = vld [vmem:[%s697 + $0x54] sm:$0xff]
        %v894 = vld [vmem:[%s697 + $0x5c] sm:$0xf]
        %v895 = vld [vmem:[%s697 + $0x60] sm:$0xff]
        %v896 = vld [vmem:[%s697 + $0x68] sm:$0xf]
        %v897 = vld [vmem:[%s697 + $0x6c] sm:$0xff]
        %v898 = vld [vmem:[%s697 + $0x74] sm:$0xf]
        %v899 = vld [vmem:[%s697 + $0x78] sm:$0xff]
        %v900 = vld [vmem:[%s697 + $0x80] sm:$0xf]
        %v901 = vld [vmem:[%s697 + $0x84] sm:$0xff]
        %v902 = vld [vmem:[%s697 + $0x8c] sm:$0xf]
        %v903 = vld [vmem:[%s697 + $0x90] sm:$0xff]
        %v904 = vld [vmem:[%s697 + $0x98] sm:$0xf]
        %v905 = vld [vmem:[%s697 + $0x9c] sm:$0xff]
        %v906 = vld [vmem:[%s697 + $0xa4] sm:$0xf]
        %v907 = vld [vmem:[%s697 + $0xa8] sm:$0xff]
        %v908 = vld [vmem:[%s697 + $0xb0] sm:$0xf]
        %v909 = vld [vmem:[%s697 + $0xb4] sm:$0xff]
        %v910 = vld [vmem:[%s697 + $0xbc] sm:$0xf]
        %v911 = vld [vmem:[%s707] sm:$0x7]
        %v913 = vperm.slane %v911, 0
        %v914 = vperm.slane %v911, 1
        %v915 = vperm.slane %v911, 2
        %v951 = vunpack.c.l.b16 %v879
        %v952 = vunpack.c.h.b16 %v879
        %v953 = vunpack.c.l.b16 %v880
        %v954 = vunpack.c.l.b16 %v881
        %v955 = vunpack.c.h.b16 %v881
        %v956 = vunpack.c.l.b16 %v882
        %v957 = vunpack.c.l.b16 %v883
        %v958 = vunpack.c.h.b16 %v883
        %v959 = vunpack.c.l.b16 %v884
        %v960 = vunpack.c.l.b16 %v885
        %v961 = vunpack.c.h.b16 %v885
        %v962 = vunpack.c.l.b16 %v886
        %v963 = vunpack.c.l.b16 %v887
        %v964 = vunpack.c.h.b16 %v887
        %v965 = vunpack.c.l.b16 %v888
        %v966 = vunpack.c.l.b16 %v889
        %v967 = vunpack.c.h.b16 %v889
        %v968 = vunpack.c.l.b16 %v890
        %v969 = vunpack.c.l.b16 %v891
        %v970 = vunpack.c.h.b16 %v891
        %v971 = vunpack.c.l.b16 %v892
        %v972 = vunpack.c.l.b16 %v893
        %v973 = vunpack.c.h.b16 %v893
        %v974 = vunpack.c.l.b16 %v894
        %v975 = vunpack.c.l.b16 %v895
        %v976 = vunpack.c.h.b16 %v895
        %v977 = vunpack.c.l.b16 %v896
        %v978 = vunpack.c.l.b16 %v897
        %v979 = vunpack.c.h.b16 %v897
        %v980 = vunpack.c.l.b16 %v898
        %v981 = vunpack.c.l.b16 %v899
        %v982 = vunpack.c.h.b16 %v899
        %v983 = vunpack.c.l.b16 %v900
        %v984 = vunpack.c.l.b16 %v901
        %v985 = vunpack.c.h.b16 %v901
        %v986 = vunpack.c.l.b16 %v902
        %v987 = vunpack.c.l.b16 %v903
        %v988 = vunpack.c.h.b16 %v903
        %v989 = vunpack.c.l.b16 %v904
        %v990 = vunpack.c.l.b16 %v905
        %v991 = vunpack.c.h.b16 %v905
        %v992 = vunpack.c.l.b16 %v906
        %v993 = vunpack.c.l.b16 %v907
        %v994 = vunpack.c.h.b16 %v907
        %v995 = vunpack.c.l.b16 %v908
        %v996 = vunpack.c.l.b16 %v909
        %v997 = vunpack.c.h.b16 %v909
        %v998 = vunpack.c.l.b16 %v910
        %v999 = vpack.c.b16 %v954, %v951
        %v1000 = vpack.c.b16 %v955, %v952
        %v1001 = vpack.c.b16 %v956, %v953
        %v1002 = vpack.c.b16 %v960, %v957
        %v1003 = vpack.c.b16 %v961, %v958
        %v1004 = vpack.c.b16 %v962, %v959
        %v1005 = vpack.c.b16 %v966, %v963
        %v1006 = vpack.c.b16 %v967, %v964
        %v1007 = vpack.c.b16 %v968, %v965
        %v1008 = vpack.c.b16 %v972, %v969
        %v1009 = vpack.c.b16 %v973, %v970
        %v1010 = vpack.c.b16 %v974, %v971
        %v1011 = vpack.c.b16 %v978, %v975
        %v1012 = vpack.c.b16 %v979, %v976
        %v1013 = vpack.c.b16 %v980, %v977
        %v1014 = vpack.c.b16 %v984, %v981
        %v1015 = vpack.c.b16 %v985, %v982
        %v1016 = vpack.c.b16 %v986, %v983
        %v1017 = vpack.c.b16 %v990, %v987
        %v1018 = vpack.c.b16 %v991, %v988
        %v1019 = vpack.c.b16 %v992, %v989
        %v1020 = vpack.c.b16 %v996, %v993
        %v1021 = vpack.c.b16 %v997, %v994
        %v1022 = vpack.c.b16 %v998, %v995
        %1047 = vmatpush.bf16.msra.mxu0 %v1020
        %1048 = vmatpush.bf16.msra.mxu0 %v1017
        %1049 = vmatpush.bf16.msra.mxu0 %v1014
        %1050 = vmatpush.bf16.msra.mxu0 %v1011
        %1051 = vmatpush.bf16.msra.mxu0 %v1008
        %1052 = vmatpush.bf16.msra.mxu0 %v1005
        %1053 = vmatpush.bf16.msra.mxu0 %v1002
        %1054 = vmatpush.bf16.msra.mxu0 %v999
        %1055 = vmatmul.bf16.gmra.mxu0 %v877
        %v1056 = vpop.f32.mrf.mxu0
        %v1057 = vadd.f32 %v913, %v1056
        %v1058 = vpop.f32.mrf.mxu0
        %1059 = vdwg.mxu0
        %1060 = vmatpush.bf16.msra.mxu0 %v1021
        %1061 = vmatpush.bf16.msra.mxu0 %v1018
        %1062 = vmatpush.bf16.msra.mxu0 %v1015
        %1063 = vmatpush.bf16.msra.mxu0 %v1012
        %1064 = vmatpush.bf16.msra.mxu0 %v1009
        %1065 = vmatpush.bf16.msra.mxu0 %v1006
        %1066 = vmatpush.bf16.msra.mxu0 %v1003
        %1067 = vmatpush.bf16.msra.mxu0 %v1000
        %1068 = vmatmul.bf16.gmra.mxu0 %v877
        %v1069 = vpop.f32.mrf.mxu0
        %v1070 = vadd.f32 %v914, %v1069
        %v1071 = vpop.f32.mrf.mxu0
        %1072 = vdwg.mxu0
        %1073 = vmatpush.bf16.msra.mxu0 %v1022
        %1074 = vmatpush.bf16.msra.mxu0 %v1019
        %1075 = vmatpush.bf16.msra.mxu0 %v1016
        %1076 = vmatpush.bf16.msra.mxu0 %v1013
        %1077 = vmatpush.bf16.msra.mxu0 %v1010
        %1078 = vmatpush.bf16.msra.mxu0 %v1007
        %1079 = vmatpush.bf16.msra.mxu0 %v1004
        %1080 = vmatpush.bf16.msra.mxu0 %v1001
        %1081 = vmatmul.bf16.gmra.mxu0 %v877
        %v1082 = vpop.f32.mrf.mxu0
        %v1083 = vadd.f32 %v915, %v1082
        %v1084 = vpop.f32.mrf.mxu0
        %1085 = vdwg.mxu0
        %v1086 = vpack.c.bf16 %v1070, %v1057
        %v1087 = vpack.c.bf16 %v1083, %v1083
        %1089 = vrot.lane.b32.xlu0 %v1086, 64
        %v1090 = vpop.permute.xlu0 %1089
        %v1091 = vrot.slane %v1086, 4
        %v1092 = vrot.slane %v1090, 4
        %1094 = vrot.lane.b32.xlu0 %v1087, 64
        %v1095 = vpop.permute.xlu0 %1094
        %v1096 = vld [vmem:[%s687] sm:$0x1]
        %v1097 = vsub.f32 1.0, %v1096
        %v1098 = vmul.f32 %v1097, -10000.0
        %vm1099 = vcmask 523264
        %v1101 = vsel %vm1099, %v1086, 0
        %v1104 = vsel %vm1099, %v1091, 0
        %1106 = vmatpush.bf16.xpose.msra.mxu0 0
        %1107 = vmatpush.bf16.xpose.msra.mxu0 0
        %1108 = vmatpush.bf16.xpose.msra.mxu0 0
        %1109 = vmatpush.bf16.xpose.msra.mxu0 0
        %1110 = vmatpush.bf16.xpose.msra.mxu0 0
        %1111 = vmatpush.bf16.xpose.msra.mxu0 0
        %1112 = vmatpush.bf16.xpose.msra.mxu0 0
        %1113 = vmatpush.bf16.xpose.msra.mxu0 %v1104
        %1114 = vmatmul.bf16.gmra.mxu0 %v1101
        %v1115 = vpop.f32.mrf.mxu0
        %v1116 = vadd.f32 0.0, %v1115
        %v1117 = vpop.f32.mrf.mxu0
        %1118 = vdwg.mxu0
        %v1120 = vsel %vm1099, %v1090, 0
        %v1123 = vsel %vm1099, %v1092, 0
        %1125 = vmatpush.bf16.xpose.msra.mxu0 0
        %1126 = vmatpush.bf16.xpose.msra.mxu0 0
        %1127 = vmatpush.bf16.xpose.msra.mxu0 0
        %1128 = vmatpush.bf16.xpose.msra.mxu0 0
        %1129 = vmatpush.bf16.xpose.msra.mxu0 0
        %1130 = vmatpush.bf16.xpose.msra.mxu0 0
        %1131 = vmatpush.bf16.xpose.msra.mxu0 0
        %1132 = vmatpush.bf16.xpose.msra.mxu0 %v1123
        %1133 = vmatmul.bf16.gmra.mxu0 %v1120
        %v1134 = vpop.f32.mrf.mxu0
        %v1135 = vadd.f32 0.0, %v1134
        %v1136 = vpop.f32.mrf.mxu0
        %1137 = vdwg.mxu0
        %v1138 = vmul.f32 %v1116, 0.125
        %v1139 = vmul.f32 %v1135, 0.125
        %v1141 = vperm.slane %v1098, 0
        %v1143 = vadd.f32 %v1138, %v1141
        %v1144 = vadd.f32 %v1139, %v1141
        %vm1145 = vcmask 64512
        %v1146 = vsel %vm1145, %v1143, -inf
        %1147 = vmax.xlane.f32.xlu0 %v1146
        %v1148 = vpop.xlane.xlu0 %1147
        %v1149 = vsel %vm1145, %v1144, -inf
        %1150 = vmax.xlane.f32.xlu0 %v1149
        %v1151 = vpop.xlane.xlu0 %1150
        %v1152 = vsub.f32 %v1143, %v1148
        %v1153 = vsub.f32 %v1144, %v1151
        %v1154 = vmul.f32 %v1152, 1.442695
        %v1155 = vpow.pop %v1154
        %v1156 = vmul.f32 %v1153, 1.442695
        %v1157 = vpow.pop %v1156
        %v1158 = vsel %vm1145, %v1155, 0.0
        %1159 = vadd.xlane.f32.xlu0 %v1158
        %v1160 = vpop.xlane.xlu0 %1159
        %v1161 = vsel %vm1145, %v1157, 0.0
        %1162 = vadd.xlane.f32.xlu0 %v1161
        %v1163 = vpop.xlane.xlu0 %1162
        %v1164 = vrcp.pop %v1160
        %v1165 = vrcp.pop %v1163
        %v1166 = vmul.f32 %v1155, %v1164
        %v1167 = vmul.f32 %v1157, %v1165
        %v1168 = vpack.c.bf16 %v1166, %v1166
        %v1169 = vpack.c.bf16 %v1167, %v1167
        %v1171 = vsel %vm1145, %v1168, 0
        %vm1173 = vcmask 1043456
        %v1175 = vsel %vm1173, %v1087, 0
        %1177 = vmatpush.bf16.msra.mxu0 0
        %1178 = vmatpush.bf16.msra.mxu0 0
        %1179 = vmatpush.bf16.msra.mxu0 0
        %1180 = vmatpush.bf16.msra.mxu0 0
        %1181 = vmatpush.bf16.msra.mxu0 0
        %1182 = vmatpush.bf16.msra.mxu0 0
        %1183 = vmatpush.bf16.msra.mxu0 0
        %1184 = vmatpush.bf16.msra.mxu0 %v1175
        %1185 = vmatmul.bf16.gmra.mxu0 %v1171
        %v1186 = vpop.f32.mrf.mxu0
        %v1187 = vadd.f32 0.0, %v1186
        %v1188 = vpop.f32.mrf.mxu0
        %1189 = vdwg.mxu0
        %v1191 = vsel %vm1145, %v1169, 0
        %v1194 = vsel %vm1173, %v1095, 0
        %1196 = vmatpush.bf16.msra.mxu0 0
        %1197 = vmatpush.bf16.msra.mxu0 0
        %1198 = vmatpush.bf16.msra.mxu0 0
        %1199 = vmatpush.bf16.msra.mxu0 0
        %1200 = vmatpush.bf16.msra.mxu0 0
        %1201 = vmatpush.bf16.msra.mxu0 0
        %1202 = vmatpush.bf16.msra.mxu0 0
        %1203 = vmatpush.bf16.msra.mxu0 %v1194
        %1204 = vmatmul.bf16.gmra.mxu0 %v1191
        %v1205 = vpop.f32.mrf.mxu0
        %v1206 = vadd.f32 0.0, %v1205
        %v1207 = vpop.f32.mrf.mxu0
        %1208 = vdwg.mxu0
        %v1209 = vld [vmem:[%s856] sm:$0x1]
        %v1211 = vperm.slane %v1209, 0
        %v1213 = vadd.f32 %v1211, 0.0
        %v1214 = vpack.c.bf16 %v1187, %v1187
        %v1215 = vld [vmem:[%s717] sm:$0xf]
        %v1216 = vld [vmem:[%s717 + $0x4] sm:$0xf]
        %v1217 = vld [vmem:[%s717 + $0x8] sm:$0xf]
        %v1218 = vld [vmem:[%s717 + $0xc] sm:$0xf]
        %v1219 = vld [vmem:[%s717 + $0x10] sm:$0xf]
        %v1220 = vld [vmem:[%s717 + $0x14] sm:$0xf]
        %v1221 = vld [vmem:[%s717 + $0x18] sm:$0xf]
        %v1222 = vld [vmem:[%s717 + $0x1c] sm:$0xf]
        %v1231 = vunpack.c.l.b16 %v1215
        %v1232 = vunpack.c.l.b16 %v1216
        %v1233 = vunpack.c.l.b16 %v1217
        %v1234 = vunpack.c.l.b16 %v1218
        %v1235 = vunpack.c.l.b16 %v1219
        %v1236 = vunpack.c.l.b16 %v1220
        %v1237 = vunpack.c.l.b16 %v1221
        %v1238 = vunpack.c.l.b16 %v1222
        %v1239 = vpack.c.b16 %v1232, %v1231
        %v1240 = vpack.c.b16 %v1234, %v1233
        %v1241 = vpack.c.b16 %v1236, %v1235
        %v1242 = vpack.c.b16 %v1238, %v1237
        %v1248 = vsel %vm1099, %v1214, 0
        %1250 = vmatpush.bf16.msra.mxu0 0
        %1251 = vmatpush.bf16.msra.mxu0 0
        %1252 = vmatpush.bf16.msra.mxu0 0
        %1253 = vmatpush.bf16.msra.mxu0 0
        %1254 = vmatpush.bf16.msra.mxu0 %v1242
        %1255 = vmatpush.bf16.msra.mxu0 %v1241
        %1256 = vmatpush.bf16.msra.mxu0 %v1240
        %1257 = vmatpush.bf16.msra.mxu0 %v1239
        %1258 = vmatmul.bf16.gmra.mxu0 %v1248
        %v1259 = vpop.f32.mrf.mxu0
        %v1260 = vadd.f32 0.0, %v1259
        %v1261 = vpop.f32.mrf.mxu0
        %1262 = vdwg.mxu0
        %v1263 = vadd.f32 %v1213, %v1260
        %v1264 = vpack.c.bf16 %v1206, %v1206
        %s1265 = scalar_lea.vmem %s717, 32 [#allocation10]
        %v1266 = vld [vmem:[%s1265] sm:$0xf]
        %v1267 = vld [vmem:[%s1265 + $0x4] sm:$0xf]
        %v1268 = vld [vmem:[%s1265 + $0x8] sm:$0xf]
        %v1269 = vld [vmem:[%s1265 + $0xc] sm:$0xf]
        %v1270 = vld [vmem:[%s1265 + $0x10] sm:$0xf]
        %v1271 = vld [vmem:[%s1265 + $0x14] sm:$0xf]
        %v1272 = vld [vmem:[%s1265 + $0x18] sm:$0xf]
        %v1273 = vld [vmem:[%s1265 + $0x1c] sm:$0xf]
        %v1282 = vunpack.c.l.b16 %v1266
        %v1283 = vunpack.c.l.b16 %v1267
        %v1284 = vunpack.c.l.b16 %v1268
        %v1285 = vunpack.c.l.b16 %v1269
        %v1286 = vunpack.c.l.b16 %v1270
        %v1287 = vunpack.c.l.b16 %v1271
        %v1288 = vunpack.c.l.b16 %v1272
        %v1289 = vunpack.c.l.b16 %v1273
        %v1290 = vpack.c.b16 %v1283, %v1282
        %v1291 = vpack.c.b16 %v1285, %v1284
        %v1292 = vpack.c.b16 %v1287, %v1286
        %v1293 = vpack.c.b16 %v1289, %v1288
        %v1299 = vsel %vm1099, %v1264, 0
        %1301 = vmatpush.bf16.msra.mxu0 0
        %1302 = vmatpush.bf16.msra.mxu0 0
        %1303 = vmatpush.bf16.msra.mxu0 0
        %1304 = vmatpush.bf16.msra.mxu0 0
        %1305 = vmatpush.bf16.msra.mxu0 %v1293
        %1306 = vmatpush.bf16.msra.mxu0 %v1292
        %1307 = vmatpush.bf16.msra.mxu0 %v1291
        %1308 = vmatpush.bf16.msra.mxu0 %v1290
        %1309 = vmatmul.bf16.gmra.mxu0 %v1299
        %v1310 = vpop.f32.mrf.mxu0
        %v1311 = vadd.f32 0.0, %v1310
        %v1312 = vpop.f32.mrf.mxu0
        %1313 = vdwg.mxu0
        %v1314 = vadd.f32 %v1263, %v1311
        %v1315 = vadd.f32 %v878, %v1314
        %v1316 = vld [vmem:[%s726] sm:$0x1]
        %v1317 = vld [vmem:[%s735] sm:$0x1]
        %1318 = vadd.xlane.f32.xlu0 %v1315
        %v1319 = vpop.xlane.xlu0 %1318
        %v1320 = vrcp.pop 128.0
        %v1321 = vmul.f32 128.0, %v1320
        %v1322 = vsub.f32 1.0, %v1321
        %v1323 = vmul.f32 %v1320, %v1322
        %v1324 = vadd.f32 %v1320, %v1323
        %vm1325 = vweird.f32 %v1320
        %v1326 = vsel %vm1325, %v1320, %v1324
        %v1327 = vmul.f32 %v1319, %v1326
        %v1328 = vsub.f32 %v1315, %v1327
        %v1329 = vmul.f32 %v1328, %v1328
        %1330 = vadd.xlane.f32.xlu0 %v1329
        %v1331 = vpop.xlane.xlu0 %1330
        %v1332 = vmul.f32 %v1331, %v1326
        %v1333 = vadd.f32 %v1332, 1e-12
        %v1334 = vrsqrt.pop %v1333
        %v1335 = vmul.f32 %v1334, %v1333
        %v1336 = vmul.f32 %v1335, %v1334
        %v1337 = vmul.f32 0.5, %v1336
        %v1338 = vsub.f32 1.5, %v1337
        %v1339 = vmul.f32 %v1334, %v1338
        %vm1340 = vweird.f32 %v1333
        %vm1341 = vweird.f32 %v1334
        %vm1342 = vmor %vm1340, %vm1341
        %v1343 = vsel %vm1342, %v1334, %v1339
        %v1344 = vmul.f32 %v1328, %v1343
        %v1346 = vperm.slane %v1316, 0
        %v1348 = vmul.f32 %v1344, %v1346
        %v1350 = vperm.slane %v1317, 0
        %v1352 = vadd.f32 %v1348, %v1350
        %v1353 = vpack.c.bf16 %v1352, %v1352
        %v1354 = vld [vmem:[%s745] sm:$0xff]
        %v1355 = vld [vmem:[%s745 + $0x8] sm:$0xff]
        %v1356 = vld [vmem:[%s745 + $0x10] sm:$0xff]
        %v1357 = vld [vmem:[%s745 + $0x18] sm:$0xff]
        %v1358 = vld [vmem:[%s745 + $0x20] sm:$0xff]
        %v1359 = vld [vmem:[%s745 + $0x28] sm:$0xff]
        %v1360 = vld [vmem:[%s745 + $0x30] sm:$0xff]
        %v1361 = vld [vmem:[%s745 + $0x38] sm:$0xff]
        %v1362 = vld [vmem:[%s745 + $0x40] sm:$0xff]
        %v1363 = vld [vmem:[%s745 + $0x48] sm:$0xff]
        %v1364 = vld [vmem:[%s745 + $0x50] sm:$0xff]
        %v1365 = vld [vmem:[%s745 + $0x58] sm:$0xff]
        %v1366 = vld [vmem:[%s745 + $0x60] sm:$0xff]
        %v1367 = vld [vmem:[%s745 + $0x68] sm:$0xff]
        %v1368 = vld [vmem:[%s745 + $0x70] sm:$0xff]
        %v1369 = vld [vmem:[%s745 + $0x78] sm:$0xff]
        %v1370 = vld [vmem:[%s860] sm:$0x3]
        %v1372 = vperm.slane %v1370, 0
        %v1373 = vperm.slane %v1370, 1
        %v1392 = vunpack.c.l.b16 %v1354
        %v1393 = vunpack.c.h.b16 %v1354
        %v1394 = vunpack.c.l.b16 %v1355
        %v1395 = vunpack.c.h.b16 %v1355
        %v1396 = vunpack.c.l.b16 %v1356
        %v1397 = vunpack.c.h.b16 %v1356
        %v1398 = vunpack.c.l.b16 %v1357
        %v1399 = vunpack.c.h.b16 %v1357
        %v1400 = vunpack.c.l.b16 %v1358
        %v1401 = vunpack.c.h.b16 %v1358
        %v1402 = vunpack.c.l.b16 %v1359
        %v1403 = vunpack.c.h.b16 %v1359
        %v1404 = vunpack.c.l.b16 %v1360
        %v1405 = vunpack.c.h.b16 %v1360
        %v1406 = vunpack.c.l.b16 %v1361
        %v1407 = vunpack.c.h.b16 %v1361
        %v1408 = vunpack.c.l.b16 %v1362
        %v1409 = vunpack.c.h.b16 %v1362
        %v1410 = vunpack.c.l.b16 %v1363
        %v1411 = vunpack.c.h.b16 %v1363
        %v1412 = vunpack.c.l.b16 %v1364
        %v1413 = vunpack.c.h.b16 %v1364
        %v1414 = vunpack.c.l.b16 %v1365
        %v1415 = vunpack.c.h.b16 %v1365
        %v1416 = vunpack.c.l.b16 %v1366
        %v1417 = vunpack.c.h.b16 %v1366
        %v1418 = vunpack.c.l.b16 %v1367
        %v1419 = vunpack.c.h.b16 %v1367
        %v1420 = vunpack.c.l.b16 %v1368
        %v1421 = vunpack.c.h.b16 %v1368
        %v1422 = vunpack.c.l.b16 %v1369
        %v1423 = vunpack.c.h.b16 %v1369
        %v1424 = vpack.c.b16 %v1394, %v1392
        %v1425 = vpack.c.b16 %v1395, %v1393
        %v1426 = vpack.c.b16 %v1398, %v1396
        %v1427 = vpack.c.b16 %v1399, %v1397
        %v1428 = vpack.c.b16 %v1402, %v1400
        %v1429 = vpack.c.b16 %v1403, %v1401
        %v1430 = vpack.c.b16 %v1406, %v1404
        %v1431 = vpack.c.b16 %v1407, %v1405
        %v1432 = vpack.c.b16 %v1410, %v1408
        %v1433 = vpack.c.b16 %v1411, %v1409
        %v1434 = vpack.c.b16 %v1414, %v1412
        %v1435 = vpack.c.b16 %v1415, %v1413
        %v1436 = vpack.c.b16 %v1418, %v1416
        %v1437 = vpack.c.b16 %v1419, %v1417
        %v1438 = vpack.c.b16 %v1422, %v1420
        %v1439 = vpack.c.b16 %v1423, %v1421
        %1456 = vmatpush.bf16.msra.mxu0 %v1438
        %1457 = vmatpush.bf16.msra.mxu0 %v1436
        %1458 = vmatpush.bf16.msra.mxu0 %v1434
        %1459 = vmatpush.bf16.msra.mxu0 %v1432
        %1460 = vmatpush.bf16.msra.mxu0 %v1430
        %1461 = vmatpush.bf16.msra.mxu0 %v1428
        %1462 = vmatpush.bf16.msra.mxu0 %v1426
        %1463 = vmatpush.bf16.msra.mxu0 %v1424
        %1464 = vmatmul.bf16.gmra.mxu0 %v1353
        %v1465 = vpop.f32.mrf.mxu0
        %v1466 = vadd.f32 %v1372, %v1465
        %v1467 = vpop.f32.mrf.mxu0
        %1468 = vdwg.mxu0
        %1469 = vmatpush.bf16.msra.mxu0 %v1439
        %1470 = vmatpush.bf16.msra.mxu0 %v1437
        %1471 = vmatpush.bf16.msra.mxu0 %v1435
        %1472 = vmatpush.bf16.msra.mxu0 %v1433
        %1473 = vmatpush.bf16.msra.mxu0 %v1431
        %1474 = vmatpush.bf16.msra.mxu0 %v1429
        %1475 = vmatpush.bf16.msra.mxu0 %v1427
        %1476 = vmatpush.bf16.msra.mxu0 %v1425
        %1477 = vmatmul.bf16.gmra.mxu0 %v1353
        %v1478 = vpop.f32.mrf.mxu0
        %v1479 = vadd.f32 %v1373, %v1478
        %v1480 = vpop.f32.mrf.mxu0
        %1481 = vdwg.mxu0
        %v1482 = vmul.f32 %v1466, 0.5
        %v1483 = vmul.f32 %v1479, 0.5
        %v1484 = vmul.f32 %v1466, 0.044715
        %v1485 = vmul.f32 %v1479, 0.044715
        %v1486 = vmul.f32 %v1484, %v1466
        %v1487 = vmul.f32 %v1485, %v1479
        %v1488 = vmul.f32 %v1486, %v1466
        %v1489 = vmul.f32 %v1487, %v1479
        %v1490 = vadd.f32 %v1466, %v1488
        %v1491 = vadd.f32 %v1479, %v1489
        %v1492 = vmul.f32 %v1490, 0.7978846
        %v1493 = vmul.f32 %v1491, 0.7978846
        %v1494 = vtanh.pop %v1492
        %v1495 = vtanh.pop %v1493
        %v1496 = vadd.f32 %v1494, 1.0
        %v1497 = vadd.f32 %v1495, 1.0
        %v1498 = vmul.f32 %v1482, %v1496
        %v1499 = vmul.f32 %v1483, %v1497
        %v1500 = vpack.c.bf16 %v1498, %v1498
        %v1501 = vpack.c.bf16 %v1499, %v1499
        %v1502 = vld [vmem:[%s755] sm:$0xf]
        %v1503 = vld [vmem:[%s755 + $0x4] sm:$0xf]
        %v1504 = vld [vmem:[%s755 + $0x8] sm:$0xf]
        %v1505 = vld [vmem:[%s755 + $0xc] sm:$0xf]
        %v1506 = vld [vmem:[%s755 + $0x10] sm:$0xf]
        %v1507 = vld [vmem:[%s755 + $0x14] sm:$0xf]
        %v1508 = vld [vmem:[%s755 + $0x18] sm:$0xf]
        %v1509 = vld [vmem:[%s755 + $0x1c] sm:$0xf]
        %v1510 = vld [vmem:[%s755 + $0x20] sm:$0xf]
        %v1511 = vld [vmem:[%s755 + $0x24] sm:$0xf]
        %v1512 = vld [vmem:[%s755 + $0x28] sm:$0xf]
        %v1513 = vld [vmem:[%s755 + $0x2c] sm:$0xf]
        %v1514 = vld [vmem:[%s755 + $0x30] sm:$0xf]
        %v1515 = vld [vmem:[%s755 + $0x34] sm:$0xf]
        %v1516 = vld [vmem:[%s755 + $0x38] sm:$0xf]
        %v1517 = vld [vmem:[%s755 + $0x3c] sm:$0xf]
        %v1518 = vld [vmem:[%s755 + $0x40] sm:$0xf]
        %v1519 = vld [vmem:[%s755 + $0x44] sm:$0xf]
        %v1520 = vld [vmem:[%s755 + $0x48] sm:$0xf]
        %v1521 = vld [vmem:[%s755 + $0x4c] sm:$0xf]
        %v1522 = vld [vmem:[%s755 + $0x50] sm:$0xf]
        %v1523 = vld [vmem:[%s755 + $0x54] sm:$0xf]
        %v1524 = vld [vmem:[%s755 + $0x58] sm:$0xf]
        %v1525 = vld [vmem:[%s755 + $0x5c] sm:$0xf]
        %v1526 = vld [vmem:[%s755 + $0x60] sm:$0xf]
        %v1527 = vld [vmem:[%s755 + $0x64] sm:$0xf]
        %v1528 = vld [vmem:[%s755 + $0x68] sm:$0xf]
        %v1529 = vld [vmem:[%s755 + $0x6c] sm:$0xf]
        %v1530 = vld [vmem:[%s755 + $0x70] sm:$0xf]
        %v1531 = vld [vmem:[%s755 + $0x74] sm:$0xf]
        %v1532 = vld [vmem:[%s755 + $0x78] sm:$0xf]
        %v1533 = vld [vmem:[%s755 + $0x7c] sm:$0xf]
        %v1534 = vld [vmem:[%s863] sm:$0x1]
        %v1536 = vperm.slane %v1534, 0
        %v1570 = vunpack.c.l.b16 %v1502
        %v1571 = vunpack.c.l.b16 %v1503
        %v1572 = vunpack.c.l.b16 %v1504
        %v1573 = vunpack.c.l.b16 %v1505
        %v1574 = vunpack.c.l.b16 %v1506
        %v1575 = vunpack.c.l.b16 %v1507
        %v1576 = vunpack.c.l.b16 %v1508
        %v1577 = vunpack.c.l.b16 %v1509
        %v1578 = vunpack.c.l.b16 %v1510
        %v1579 = vunpack.c.l.b16 %v1511
        %v1580 = vunpack.c.l.b16 %v1512
        %v1581 = vunpack.c.l.b16 %v1513
        %v1582 = vunpack.c.l.b16 %v1514
        %v1583 = vunpack.c.l.b16 %v1515
        %v1584 = vunpack.c.l.b16 %v1516
        %v1585 = vunpack.c.l.b16 %v1517
        %v1586 = vunpack.c.l.b16 %v1518
        %v1587 = vunpack.c.l.b16 %v1519
        %v1588 = vunpack.c.l.b16 %v1520
        %v1589 = vunpack.c.l.b16 %v1521
        %v1590 = vunpack.c.l.b16 %v1522
        %v1591 = vunpack.c.l.b16 %v1523
        %v1592 = vunpack.c.l.b16 %v1524
        %v1593 = vunpack.c.l.b16 %v1525
        %v1594 = vunpack.c.l.b16 %v1526
        %v1595 = vunpack.c.l.b16 %v1527
        %v1596 = vunpack.c.l.b16 %v1528
        %v1597 = vunpack.c.l.b16 %v1529
        %v1598 = vunpack.c.l.b16 %v1530
        %v1599 = vunpack.c.l.b16 %v1531
        %v1600 = vunpack.c.l.b16 %v1532
        %v1601 = vunpack.c.l.b16 %v1533
        %v1602 = vpack.c.b16 %v1571, %v1570
        %v1603 = vpack.c.b16 %v1573, %v1572
        %v1604 = vpack.c.b16 %v1575, %v1574
        %v1605 = vpack.c.b16 %v1577, %v1576
        %v1606 = vpack.c.b16 %v1579, %v1578
        %v1607 = vpack.c.b16 %v1581, %v1580
        %v1608 = vpack.c.b16 %v1583, %v1582
        %v1609 = vpack.c.b16 %v1585, %v1584
        %v1610 = vpack.c.b16 %v1587, %v1586
        %v1611 = vpack.c.b16 %v1589, %v1588
        %v1612 = vpack.c.b16 %v1591, %v1590
        %v1613 = vpack.c.b16 %v1593, %v1592
        %v1614 = vpack.c.b16 %v1595, %v1594
        %v1615 = vpack.c.b16 %v1597, %v1596
        %v1616 = vpack.c.b16 %v1599, %v1598
        %v1617 = vpack.c.b16 %v1601, %v1600
        %1634 = vmatpush.bf16.msra.mxu0 %v1609
        %1635 = vmatpush.bf16.msra.mxu0 %v1608
        %1636 = vmatpush.bf16.msra.mxu0 %v1607
        %1637 = vmatpush.bf16.msra.mxu0 %v1606
        %1638 = vmatpush.bf16.msra.mxu0 %v1605
        %1639 = vmatpush.bf16.msra.mxu0 %v1604
        %1640 = vmatpush.bf16.msra.mxu0 %v1603
        %1641 = vmatpush.bf16.msra.mxu0 %v1602
        %1642 = vmatmul.bf16.gmra.mxu0 %v1500
        %v1643 = vpop.f32.mrf.mxu0
        %v1644 = vadd.f32 %v1536, %v1643
        %v1645 = vpop.f32.mrf.mxu0
        %1646 = vdwg.mxu0
        %1647 = vmatpush.bf16.msra.mxu0 %v1617
        %1648 = vmatpush.bf16.msra.mxu0 %v1616
        %1649 = vmatpush.bf16.msra.mxu0 %v1615
        %1650 = vmatpush.bf16.msra.mxu0 %v1614
        %1651 = vmatpush.bf16.msra.mxu0 %v1613
        %1652 = vmatpush.bf16.msra.mxu0 %v1612
        %1653 = vmatpush.bf16.msra.mxu0 %v1611
        %1654 = vmatpush.bf16.msra.mxu0 %v1610
        %1655 = vmatmul.bf16.gmra.mxu0 %v1501
        %v1656 = vpop.f32.mrf.mxu0
        %v1657 = vadd.f32 %v1644, %v1656
        %v1658 = vpop.f32.mrf.mxu0
        %1659 = vdwg.mxu0
        %v1660 = vadd.f32 %v1352, %v1657
        %v1661 = vld [vmem:[%s866] sm:$0x1]
        %v1662 = vld [vmem:[%s869] sm:$0x1]
        %1663 = vadd.xlane.f32.xlu0 %v1660
        %v1664 = vpop.xlane.xlu0 %1663
        %v1665 = vmul.f32 %v1664, %v1326
        %v1666 = vsub.f32 %v1660, %v1665
        %v1667 = vmul.f32 %v1666, %v1666
        %1668 = vadd.xlane.f32.xlu0 %v1667
        %v1669 = vpop.xlane.xlu0 %1668
        %v1670 = vmul.f32 %v1669, %v1326
        %v1671 = vadd.f32 %v1670, 1e-12
        %v1672 = vrsqrt.pop %v1671
        %v1673 = vmul.f32 %v1672, %v1671
        %v1674 = vmul.f32 %v1673, %v1672
        %v1675 = vmul.f32 0.5, %v1674
        %v1676 = vsub.f32 1.5, %v1675
        %v1677 = vmul.f32 %v1672, %v1676
        %vm1678 = vweird.f32 %v1671
        %vm1679 = vweird.f32 %v1672
        %vm1680 = vmor %vm1678, %vm1679
        %v1681 = vsel %vm1680, %v1672, %v1677
        %v1682 = vmul.f32 %v1666, %v1681
        %v1684 = vperm.slane %v1661, 0
        %v1686 = vmul.f32 %v1682, %v1684
        %v1688 = vperm.slane %v1662, 0
        %v1690 = vadd.f32 %v1686, %v1688
        %v1691 = vpack.c.bf16 %v1690, %v1690
        %1692 = vst [vmem:[%s853] sm:$0xf] %v1691
        %s1693 = sand.u32 %s427, 1
        %s1694 = scalar_lea.sflag [#allocation4], %s1693
        %s1695 = sand.u32 %s427, 1
        %s1696 = smul.addr %s1695, 4
        %s1697 = scalar_lea.vmem [#allocation17], %s1696
        // Predicated region
        $region117: #{tpu_custom_call.1} parent=75 // pred_check
          %p1698 = pneg %p437
        $region118: #{tpu_custom_call.1} parent=75 // pred_check_branch
          %1700 = sbr.rel (%p1698) target = $region120
        $region119: #{tpu_custom_call.1} parent=75 // pred_region
          %1702 = vsyncadd %s1694, 0
          %s1703 = smul.addr %s47, 4
          %s1704 = scalar_lea.hbm %s14, %s1703
          %s1706 = sshll.u32 %s1697, 4
          %s1707 = int_to_ptr.vmem [resolvable:$true] %s1706
          %s1708 = sshll.u32 %s1704, 4
          %s1709 = int_to_ptr.hbm [resolvable:$true] %s1708
          %1711 = dma.vmem_to_hbm [thread:$0]  %s1707, 64, %s1709, %s1694
        $region120: #{tpu_custom_call.1} parent=75 // pred_fallthru
          _
      $region76: #{tpu_custom_call.1} parent=5 // pred_fallthru
        _
      %p1712 = scmp.le.s32.totalorder 2, %s38
      // Predicated region
      $region121: #{tpu_custom_call.1} parent=5 // pred_check
        %p1713 = pneg %p1712
      $region122: #{tpu_custom_call.1} parent=5 // pred_check_branch
        %1715 = sbr.rel (%p1713) target = $region124
      $region123: #{tpu_custom_call.1} parent=5 // pred_region
        %s1716 = ssub.s32 %s38, 2
        // Predicated region
        $region125: #{tpu_custom_call.1} parent=123 // pred_check
          %p1717 = pneg %p443
        $region126: #{tpu_custom_call.1} parent=123 // pred_check_branch
          %1719 = sbr.rel (%p1717) target = $region128
        $region127: #{tpu_custom_call.1} parent=123 // pred_region
          %s1720 = sand.u32 %s428, 1
          %s1721 = scalar_lea.sflag [#allocation4], %s1720
          %s1722 = sand.u32 %s428, 1
          %s1723 = smul.addr %s1722, 4
          %s1724 = scalar_lea.vmem [#allocation17], %s1723
          %1726 = dma.done %s1721, 64
        $region128: #{tpu_custom_call.1} parent=123 // pred_fallthru
          _
      $region124: #{tpu_custom_call.1} parent=5 // pred_fallthru
        _
    $region6: #{tpu_custom_call.1} parent=1 // loop_footer
      %s42 = sadd.s32 1, %s38
    $region7: #{tpu_custom_call.1} parent=1 // loop_footer_branch
      %37 = sbr.rel target = $region3
    $region8: #{tpu_custom_call.1} parent=1 // loop_exit
      _
    %1727 = vsyncpa [#allocation3], 1
    %s1728 = scalar_lea.sflag [#allocation3], 1
    %1729 = vsyncpa %s1728, 1
    %1730 = vsyncpa [#allocation6], 1
    %s1731 = scalar_lea.sflag [#allocation6], 1
    %1732 = vsyncpa %s1731, 1
    %1733 = vsyncpa [#allocation9], 1
    %s1734 = scalar_lea.sflag [#allocation9], 1
    %1735 = vsyncpa %s1734, 1
    %1736 = vsyncpa [#allocation12], 1
    %s1737 = scalar_lea.sflag [#allocation12], 1
    %1738 = vsyncpa %s1737, 1
    %1739 = vsyncpa [#allocation15], 1
    %s1740 = scalar_lea.sflag [#allocation15], 1
    %1741 = vsyncpa %s1740, 1
    %1742 = vsyncpa [#allocation4], 1
    %s1743 = scalar_lea.sflag [#allocation4], 1
    %1744 = vsyncpa %s1743, 1

</llo_original>
